<compile_context>
chip_gen: v6e
topology: v6e:2x2x1
jax: 0.10.0
libtpu: 0.0.40
codegen_flags: <defaults>
</compile_context>

<pallas_src>
import functools

import jax
import jax.numpy as jnp
from jax.experimental import pallas as pl
from jax.experimental.pallas import tpu as pltpu

EPS = 1e-5      # BatchNorm2d default eps
LANE = 128      # TPU lane width; channels are padded to this


def _round_up(v, m):
    return (v + m - 1) // m * m


def _cdiv(a, b):
    return -(-a // b)


# ---------------------------------------------------------------------------
# Kernels
# ---------------------------------------------------------------------------
def _conv1_kernel(x_ref, w_ref, *rest, stride, ho, wo, bt, cin_p, has_proj):
    """conv1 (3x3/stride) as ONE long-K MXU matmul over an in-VMEM im2col slab
    + packed partial BN stats.  Optionally also the 1x1 strided shortcut conv
    (it is exactly the centre tap of the same slab)."""
    if has_proj:
        ws_ref, c_ref, s_ref, st_ref, im_ref = rest
    else:
        c_ref, st_ref, im_ref = rest

    m0 = ho * wo
    cout_p = c_ref.shape[-1]

    # Build the (bt*ho*wo, 9*cin_p) bf16 im2col slab with lane-aligned stores.
    for b in range(bt):
        for kh in range(3):
            for kw in range(3):
                t = kh * 3 + kw
                ph, ih = kh % stride, kh // stride
                pw, iw = kw % stride, kw // stride
                tap = x_ref[b, ph * stride + pw, ih:ih + ho, iw:iw + wo, :]
                im_ref[b * m0:(b + 1) * m0, t * cin_p:(t + 1) * cin_p] = (
                    tap.reshape(m0, cin_p))

    # Single K = 9*cin_p matmul; accumulation happens inside the MXU.
    acc = jnp.dot(im_ref[...], w_ref[...], preferred_element_type=jnp.float32)
    c_ref[...] = acc.reshape(bt, ho, wo, cout_p).astype(c_ref.dtype)

    stats = [jnp.sum(acc, axis=0, keepdims=True),
             jnp.sum(acc * acc, axis=0, keepdims=True)]

    if has_proj:
        # 1x1 strided shortcut conv == centre tap (kh=kw=1) of the slab.
        centre = im_ref[:, 4 * cin_p:5 * cin_p]
        sacc = jnp.dot(centre, ws_ref[...], preferred_element_type=jnp.float32)
        s_ref[...] = sacc.reshape(bt, ho, wo, cout_p).astype(s_ref.dtype)
        stats += [jnp.sum(sacc, axis=0, keepdims=True),
                  jnp.sum(sacc * sacc, axis=0, keepdims=True)]

    st_ref[0] = jnp.concatenate(stats, axis=0)


def _conv2_kernel(c1_ref, bn1_ref, w_ref, c2_ref, st_ref, pad_ref, im_ref,
                  *, ho, wo, bt):
    """BN1 (folded scale/shift) + ReLU + conv2 (3x3, stride 1) + packed partial
    BN stats, fused.  Spatial halo lives in a bf16 VMEM scratch."""
    cp = c1_ref.shape[-1]
    m0 = ho * wo

    # Only the halo needs zeros — the interior is fully overwritten below.
    # (Per-step halo zeroing keeps megacore-sharded grids correct.)
    zrow = jnp.zeros((bt, 1, wo + 2, cp), pad_ref.dtype)
    zcol = jnp.zeros((bt, ho + 2, 1, cp), pad_ref.dtype)
    pad_ref[:, 0:1, :, :] = zrow
    pad_ref[:, ho + 1:ho + 2, :, :] = zrow
    pad_ref[:, :, 0:1, :] = zcol
    pad_ref[:, :, wo + 1:wo + 2, :] = zcol

    # BN1 + ReLU in f32, stored bf16 into the padded scratch interior.
    y1 = jnp.maximum(
        c1_ref[...].astype(jnp.float32) * bn1_ref[0:1] + bn1_ref[1:2], 0.0)
    pad_ref[:, 1:1 + ho, 1:1 + wo, :] = y1.astype(pad_ref.dtype)

    # im2col slab for conv2, then one long-K matmul.
    for b in range(bt):
        for kh in range(3):
            for kw in range(3):
                t = kh * 3 + kw
                im_ref[b * m0:(b + 1) * m0, t * cp:(t + 1) * cp] = (
                    pad_ref[b, kh:kh + ho, kw:kw + wo, :].reshape(m0, cp))

    acc = jnp.dot(im_ref[...], w_ref[...], preferred_element_type=jnp.float32)
    c2_ref[...] = acc.reshape(bt, ho, wo, cp).astype(c2_ref.dtype)
    st_ref[0] = jnp.concatenate(
        [jnp.sum(acc, axis=0, keepdims=True),
         jnp.sum(acc * acc, axis=0, keepdims=True)], axis=0)


def _finalize_proj_kernel(c2_ref, s_ref, bn2_ref, bns_ref, o_ref):
    """BN2 + projection-shortcut BN + add + ReLU."""
    y = c2_ref[...].astype(jnp.float32) * bn2_ref[0:1] + bn2_ref[1:2]
    s = s_ref[...].astype(jnp.float32) * bns_ref[0:1] + bns_ref[1:2]
    o_ref[...] = jnp.maximum(y + s, 0.0).astype(o_ref.dtype)


def _finalize_id_kernel(c2_ref, x_ref, bn2_ref, o_ref, *, ho, wo, bt):
    """BN2 + identity shortcut (read from the phased/padded input) + ReLU."""
    y = c2_ref[...].astype(jnp.float32) * bn2_ref[0:1] + bn2_ref[1:2]
    for b in range(bt):
        short = x_ref[b, 0, 1:1 + ho, 1:1 + wo, :].astype(jnp.float32)
        o_ref[b] = jnp.maximum(y[b] + short, 0.0).astype(o_ref.dtype)


# ---------------------------------------------------------------------------
# Wrapper glue (plain JAX: layout packing + tiny stat folds)
# ---------------------------------------------------------------------------
def _pack3x3(w_oihw, ci_p, co_p):
    """(Cout,Cin,3,3) -> (9*Cin_pad, Cout_pad) bf16, tap-major rows."""
    co, ci, kh, kw = w_oihw.shape
    wm = jnp.transpose(w_oihw, (2, 3, 1, 0)).reshape(kh * kw, ci, co)
    wm = jnp.pad(wm, ((0, 0), (0, ci_p - ci), (0, co_p - co)))
    return wm.reshape(kh * kw * ci_p, co_p).astype(jnp.bfloat16)


def _fold_bn(stats, row, gamma, beta, count):
    """Global batch stats from packed per-tile partials -> (2,C) [scale;shift]."""
    s = jnp.sum(stats[:, row], axis=0)
    q = jnp.sum(stats[:, row + 1], axis=0)
    mean = s / count
    var = jnp.maximum(q / count - mean * mean, 0.0)   # biased var (training BN)
    scale = gamma * jax.lax.rsqrt(var + EPS)
    shift = beta - mean * scale
    return jnp.stack([scale, shift], axis=0).astype(jnp.float32)


def _pick_btile(n, ho, wo, cin_p, cout_p, budget_bytes=8 * 1024 * 1024):
    """Largest divisor of n whose im2col slab fits the budget while keeping
    >= 2 grid steps (so both v7x TensorCores get work)."""
    per_sample = ho * wo * 9 * max(cin_p, cout_p) * 2
    cap = max(1, budget_bytes // per_sample)
    best = 1
    for cand in range(1, min(n, cap) + 1):
        if n % cand == 0 and n // cand >= 2:
            best = cand
    return best


def _compiler_params():
    # Generation-aware VMEM budget (64 MiB/TC on v7x vs 128 MiB on v5e/v6e).
    try:
        cap = int(pltpu.get_tpu_info().vmem_capacity_bytes)
    except Exception:
        cap = 64 * 1024 * 1024
    return pltpu.CompilerParams(
        dimension_semantics=("parallel",),
        vmem_limit_bytes=int(min(cap * 3 // 4, 96 * 1024 * 1024)))


def basic_block_forward(x_nchw, params, stride):
    n, cin, h, w = x_nchw.shape
    planes = params["w1"].shape[0]
    cin_p = _round_up(cin, LANE)
    cout_p = _round_up(planes, LANE)
    ho = (h + 2 - 3) // stride + 1
    wo = (w + 2 - 3) // stride + 1
    has_proj = (stride != 1) or (cin != planes)
    count = n * ho * wo

    bt = _pick_btile(n, ho, wo, cin_p, cout_p)
    nt = n // bt
    m = bt * ho * wo
    s2 = stride * stride

    x_nhwc = jnp.transpose(x_nchw, (0, 2, 3, 1)).astype(jnp.float32)

    # Phased (space-to-depth) padded input: strided conv taps become
    # unit-stride static slices.  Width padded to a multiple of 8 (sublanes).
    xpad = jnp.pad(x_nhwc, ((0, 0), (1, 1), (1, 1), (0, cin_p - cin)))
    hp, wp = h + 2, w + 2
    hs_ph = _cdiv(hp, stride)
    ws_ph = _round_up(_cdiv(wp, stride), 8)
    xpad = jnp.pad(xpad, ((0, 0), (0, hs_ph * stride - hp),
                          (0, ws_ph * stride - wp), (0, 0)))
    xph = xpad.reshape(n, hs_ph, stride, ws_ph, stride, cin_p)
    xph = jnp.transpose(xph, (0, 2, 4, 1, 3, 5))
    xph = xph.reshape(n, s2, hs_ph, ws_ph, cin_p).astype(jnp.bfloat16)

    w1m = _pack3x3(params["w1"], cin_p, cout_p)      # (9*cin_p, cout_p) bf16
    w2m = _pack3x3(params["w2"], cout_p, cout_p)     # (9*cout_p, cout_p) bf16

    def pad_vec(v):
        # NOTE: gamma is intentionally zero-padded so padded lanes get
        # scale = shift = 0 and stay exactly zero through BN/ReLU/conv2.
        return jnp.pad(v.astype(jnp.float32), (0, cout_p - planes))

    g1, b1 = pad_vec(params["g1"]), pad_vec(params["b1"])
    g2, b2 = pad_vec(params["g2"]), pad_vec(params["b2"])

    cparams = _compiler_params()

    # Shared BlockSpecs / shapes
    x_spec = pl.BlockSpec((bt, s2, hs_ph, ws_ph, cin_p),
                          lambda i: (i, 0, 0, 0, 0))
    w1_spec = pl.BlockSpec((9 * cin_p, cout_p), lambda i: (0, 0))
    w2_spec = pl.BlockSpec((9 * cout_p, cout_p), lambda i: (0, 0))
    act_spec = pl.BlockSpec((bt, ho, wo, cout_p), lambda i: (i, 0, 0, 0))
    bn_spec = pl.BlockSpec((2, cout_p), lambda i: (0, 0))

    act_shape = jax.ShapeDtypeStruct((n, ho, wo, cout_p), jnp.bfloat16)
    out_shape = jax.ShapeDtypeStruct((n, ho, wo, cout_p), jnp.float32)
    act_bytes = n * ho * wo * cout_p * 2

    # --- Pass 1: conv1 (+ optional 1x1 shortcut conv) + packed BN partials ---
    if has_proj:
        wsm = jnp.pad(params["ws"][:, :, 0, 0].T,
                      ((0, cin_p - cin), (0, cout_p - planes))).astype(jnp.bfloat16)
        gs, bs = pad_vec(params["gs"]), pad_vec(params["bs"])
        ws_spec = pl.BlockSpec((cin_p, cout_p), lambda i: (0, 0))
        st1_spec = pl.BlockSpec((1, 4, cout_p), lambda i: (i, 0, 0))
        st1_shape = jax.ShapeDtypeStruct((nt, 4, cout_p), jnp.float32)
        kern_a = functools.partial(_conv1_kernel, stride=stride, ho=ho, wo=wo,
                                   bt=bt, cin_p=cin_p, has_proj=True)
        c1, sraw, st1 = pl.pallas_call(
            kern_a, grid=(nt,),
            in_specs=[x_spec, w1_spec, ws_spec],
            out_specs=(act_spec, act_spec, st1_spec),
            out_shape=(act_shape, act_shape, st1_shape),
            scratch_shapes=[pltpu.VMEM((m, 9 * cin_p), jnp.bfloat16)],
            compiler_params=cparams,
            cost_estimate=pl.CostEstimate(
                flops=2 * count * (9 + 1) * cin_p * cout_p, transcendentals=0,
                bytes_accessed=xph.size * 2 + (w1m.size + wsm.size) * 2
                + 2 * act_bytes),
        )(xph, w1m, wsm)
    else:
        st1_spec = pl.BlockSpec((1, 2, cout_p), lambda i: (i, 0, 0))
        st1_shape = jax.ShapeDtypeStruct((nt, 2, cout_p), jnp.float32)
        kern_a = functools.partial(_conv1_kernel, stride=stride, ho=ho, wo=wo,
                                   bt=bt, cin_p=cin_p, has_proj=False)
        c1, st1 = pl.pallas_call(
            kern_a, grid=(nt,),
            in_specs=[x_spec, w1_spec],
            out_specs=(act_spec, st1_spec),
            out_shape=(act_shape, st1_shape),
            scratch_shapes=[pltpu.VMEM((m, 9 * cin_p), jnp.bfloat16)],
            compiler_params=cparams,
            cost_estimate=pl.CostEstimate(
                flops=2 * count * 9 * cin_p * cout_p, transcendentals=0,
                bytes_accessed=xph.size * 2 + w1m.size * 2 + act_bytes),
        )(xph, w1m)

    bn1 = _fold_bn(st1, 0, g1, b1, count)

    # --- Pass 2: BN1 + ReLU + conv2 + packed BN partials (fused) -------------
    st2_spec = pl.BlockSpec((1, 2, cout_p), lambda i: (i, 0, 0))
    st2_shape = jax.ShapeDtypeStruct((nt, 2, cout_p), jnp.float32)
    kern_b = functools.partial(_conv2_kernel, ho=ho, wo=wo, bt=bt)
    c2, st2 = pl.pallas_call(
        kern_b, grid=(nt,),
        in_specs=[act_spec, bn_spec, w2_spec],
        out_specs=(act_spec, st2_spec),
        out_shape=(act_shape, st2_shape),
        scratch_shapes=[pltpu.VMEM((bt, ho + 2, wo + 2, cout_p), jnp.bfloat16),
                        pltpu.VMEM((m, 9 * cout_p), jnp.bfloat16)],
        compiler_params=cparams,
        cost_estimate=pl.CostEstimate(
            flops=2 * count * 9 * cout_p * cout_p, transcendentals=0,
            bytes_accessed=2 * act_bytes + w2m.size * 2),
    )(c1, bn1, w2m)

    bn2 = _fold_bn(st2, 0, g2, b2, count)

    # --- Pass 3: BN2 + shortcut + add + ReLU ---------------------------------
    out_spec = pl.BlockSpec((bt, ho, wo, cout_p), lambda i: (i, 0, 0, 0))
    if has_proj:
        bns = _fold_bn(st1, 2, gs, bs, count)
        out = pl.pallas_call(
            _finalize_proj_kernel, grid=(nt,),
            in_specs=[act_spec, act_spec, bn_spec, bn_spec],
            out_specs=out_spec, out_shape=out_shape,
            compiler_params=cparams,
            cost_estimate=pl.CostEstimate(
                flops=6 * count * cout_p, transcendentals=0,
                bytes_accessed=2 * act_bytes + n * ho * wo * cout_p * 4),
        )(c2, sraw, bn2, bns)
    else:
        kern_c = functools.partial(_finalize_id_kernel, ho=ho, wo=wo, bt=bt)
        out = pl.pallas_call(
            kern_c, grid=(nt,),
            in_specs=[act_spec, x_spec, bn_spec],
            out_specs=out_spec, out_shape=out_shape,
            compiler_params=cparams,
            cost_estimate=pl.CostEstimate(
                flops=4 * count * cout_p, transcendentals=0,
                bytes_accessed=act_bytes + xph.size * 2
                + n * ho * wo * cout_p * 4),
        )(c2, xph, bn2)

    out = out[..., :planes]                    # drop channel padding
    return jnp.transpose(out, (0, 3, 1, 2))    # back to NCHW


# ---------------------------------------------------------------------------
# Pure-JAX reference (independent path, for correctness check)
# ---------------------------------------------------------------------------
def _ref_conv(x, w, stride, pad):
    return jax.lax.conv_general_dilated(
        x, w, (stride, stride), [(pad, pad), (pad, pad)],
        dimension_numbers=("NCHW", "OIHW", "NCHW"),
        precision=jax.lax.Precision.HIGHEST)


def _ref_bn(x, g, b):
    mu = x.mean(axis=(0, 2, 3), keepdims=True)
    var = jnp.square(x - mu).mean(axis=(0, 2, 3), keepdims=True)
    return (x - mu) * jax.lax.rsqrt(var + EPS) * g.reshape(1, -1, 1, 1) \
        + b.reshape(1, -1, 1, 1)


def reference_forward(x, params, stride):
    out = jnp.maximum(_ref_bn(_ref_conv(x, params["w1"], stride, 1),
                              params["g1"], params["b1"]), 0.0)
    out = _ref_bn(_ref_conv(out, params["w2"], 1, 1),
                  params["g2"], params["b2"])
    if "ws" in params:
        sc = _ref_bn(_ref_conv(x, params["ws"], stride, 0),
                     params["gs"], params["bs"])
    else:
        sc = x
    return jnp.maximum(out + sc, 0.0)


# ---------------------------------------------------------------------------
def make_params(key, in_planes, planes, stride):
    k = jax.random.split(key, 7)
    p = {
        "w1": jax.random.normal(k[0], (planes, in_planes, 3, 3), jnp.float32) * 0.1,
        "g1": 1.0 + 0.1 * jax.random.normal(k[1], (planes,), jnp.float32),
        "b1": 0.1 * jax.random.normal(k[2], (planes,), jnp.float32),
        "w2": jax.random.normal(k[3], (planes, planes, 3, 3), jnp.float32) * 0.1,
        "g2": 1.0 + 0.1 * jax.random.normal(k[4], (planes,), jnp.float32),
        "b2": 0.1 * jax.random.normal(k[5], (planes,), jnp.float32),
    }
    if stride != 1 or in_planes != planes:
        kk = jax.random.split(k[6], 3)
        p["ws"] = jax.random.normal(kk[0], (planes, in_planes, 1, 1), jnp.float32) * 0.1
        p["gs"] = 1.0 + 0.1 * jax.random.normal(kk[1], (planes,), jnp.float32)
        p["bs"] = 0.1 * jax.random.normal(kk[2], (planes,), jnp.float32)
    return p


if __name__ == "__main__":
    root = jax.random.PRNGKey(0)
    kx1, kp1, kx2, kp2 = jax.random.split(root, 4)

    # Case 1: projection shortcut (stride=2, channel change): x (2,4,16,16)
    in_planes, planes, stride = 4, 8, 2
    x1 = jax.random.normal(kx1, (2, in_planes, 16, 16), jnp.float32)
    params1 = make_params(kp1, in_planes, planes, stride)
    y1 = jax.block_until_ready(basic_block_forward(x1, params1, stride))
    r1 = reference_forward(x1, params1, stride)
    assert y1.shape == (2, planes, 8, 8)
    assert bool(jnp.allclose(y1, r1, rtol=2e-2, atol=2e-2)), "projection path mismatch"

    # Case 2: identity shortcut (stride=1, same channels): x (2,8,16,16)
    in_planes, planes, stride = 8, 8, 1
    x2 = jax.random.normal(kx2, (2, in_planes, 16, 16), jnp.float32)
    params2 = make_params(kp2, in_planes, planes, stride)
    y2 = jax.block_until_ready(basic_block_forward(x2, params2, stride))
    r2 = reference_forward(x2, params2, stride)
    assert y2.shape == (2, planes, 16, 16)
    assert bool(jnp.allclose(y2, r2, rtol=2e-2, atol=2e-2)), "identity path mismatch"

    print("KERNEL_OK")
</pallas_src>

<mosaic_0001>
module attributes {stable_mosaic.version = 11 : i64} {
  func.func @_conv1_kernel(%arg0: i32, %arg1: memref<1x4x9x16x128xbf16, #tpu.memory_space<vmem>>, %arg2: memref<1152x128xbf16, #tpu.memory_space<vmem>>, %arg3: memref<128x128xbf16, #tpu.memory_space<vmem>>, %arg4: memref<1x8x8x128xbf16, #tpu.memory_space<vmem>>, %arg5: memref<1x8x8x128xbf16, #tpu.memory_space<vmem>>, %arg6: memref<1x4x128xf32, #tpu.memory_space<vmem>>, %arg7: memref<64x1152xbf16, #tpu.memory_space<vmem>>) attributes {dimension_semantics = [#tpu.dimension_semantics<parallel>], iteration_bounds = array<i64: 2>, scalar_prefetch = 0 : i64, scratch_operands = 1 : i64, tpu.core_type = #tpu.core_type<tc>, window_params = [{transform_indices = @transform_0, window_bounds = array<i64: 1, 4, 9, 16, 128>}, {pipeline_mode = #tpu.pipeline_mode<synchronous>, transform_indices = @transform_1, window_bounds = array<i64: 1152, 128>}, {pipeline_mode = #tpu.pipeline_mode<synchronous>, transform_indices = @transform_2, window_bounds = array<i64: 128, 128>}, {transform_indices = @transform_3, window_bounds = array<i64: 1, 8, 8, 128>}, {transform_indices = @transform_4, window_bounds = array<i64: 1, 8, 8, 128>}, {transform_indices = @transform_5, window_bounds = array<i64: 1, 4, 128>}]} {
    %c0 = arith.constant 0 : index
    %c0_0 = arith.constant 0 : index
    %c0_1 = arith.constant 0 : index
    %c0_2 = arith.constant 0 : index
    %c0_3 = arith.constant 0 : index
    %0 = vector.load %arg1[%c0, %c0_0, %c0_1, %c0_2, %c0_3] : memref<1x4x9x16x128xbf16, #tpu.memory_space<vmem>>, vector<1x1x8x8x128xbf16>
    %1 = vector.shape_cast %0 : vector<1x1x8x8x128xbf16> to vector<8x8x128xbf16>
    %2 = vector.shape_cast %1 : vector<8x8x128xbf16> to vector<64x128xbf16>
    %c0_4 = arith.constant 0 : index
    %c0_5 = arith.constant 0 : index
    %3 = vector.load %arg7[%c0_4, %c0_5] : memref<64x1152xbf16, #tpu.memory_space<vmem>>, vector<64x128xbf16>
    tpu.vector_store %arg7[%c0_4, %c0_5], %2 {strides = array<i32>} : memref<64x1152xbf16, #tpu.memory_space<vmem>>, vector<64x128xbf16>,
    %c0_6 = arith.constant 0 : index
    %c1 = arith.constant 1 : index
    %c0_7 = arith.constant 0 : index
    %c0_8 = arith.constant 0 : index
    %c0_9 = arith.constant 0 : index
    %4 = vector.load %arg1[%c0_6, %c1, %c0_7, %c0_8, %c0_9] : memref<1x4x9x16x128xbf16, #tpu.memory_space<vmem>>, vector<1x1x8x8x128xbf16>
    %5 = vector.shape_cast %4 : vector<1x1x8x8x128xbf16> to vector<8x8x128xbf16>
    %6 = vector.shape_cast %5 : vector<8x8x128xbf16> to vector<64x128xbf16>
    %c0_10 = arith.constant 0 : index
    %c128 = arith.constant 128 : index
    %7 = vector.load %arg7[%c0_10, %c128] : memref<64x1152xbf16, #tpu.memory_space<vmem>>, vector<64x128xbf16>
    tpu.vector_store %arg7[%c0_10, %c128], %6 {strides = array<i32>} : memref<64x1152xbf16, #tpu.memory_space<vmem>>, vector<64x128xbf16>,
    %c0_11 = arith.constant 0 : index
    %c0_12 = arith.constant 0 : index
    %c0_13 = arith.constant 0 : index
    %c1_14 = arith.constant 1 : index
    %c0_15 = arith.constant 0 : index
    %8 = vector.load %arg1[%c0_11, %c0_12, %c0_13, %c1_14, %c0_15] : memref<1x4x9x16x128xbf16, #tpu.memory_space<vmem>>, vector<1x1x8x8x128xbf16>
    %9 = vector.shape_cast %8 : vector<1x1x8x8x128xbf16> to vector<8x8x128xbf16>
    %10 = vector.shape_cast %9 : vector<8x8x128xbf16> to vector<64x128xbf16>
    %c0_16 = arith.constant 0 : index
    %c256 = arith.constant 256 : index
    %11 = vector.load %arg7[%c0_16, %c256] : memref<64x1152xbf16, #tpu.memory_space<vmem>>, vector<64x128xbf16>
    tpu.vector_store %arg7[%c0_16, %c256], %10 {strides = array<i32>} : memref<64x1152xbf16, #tpu.memory_space<vmem>>, vector<64x128xbf16>,
    %c0_17 = arith.constant 0 : index
    %c2 = arith.constant 2 : index
    %c0_18 = arith.constant 0 : index
    %c0_19 = arith.constant 0 : index
    %c0_20 = arith.constant 0 : index
    %12 = vector.load %arg1[%c0_17, %c2, %c0_18, %c0_19, %c0_20] : memref<1x4x9x16x128xbf16, #tpu.memory_space<vmem>>, vector<1x1x8x8x128xbf16>
    %13 = vector.shape_cast %12 : vector<1x1x8x8x128xbf16> to vector<8x8x128xbf16>
    %14 = vector.shape_cast %13 : vector<8x8x128xbf16> to vector<64x128xbf16>
    %c0_21 = arith.constant 0 : index
    %c384 = arith.constant 384 : index
    %15 = vector.load %arg7[%c0_21, %c384] : memref<64x1152xbf16, #tpu.memory_space<vmem>>, vector<64x128xbf16>
    tpu.vector_store %arg7[%c0_21, %c384], %14 {strides = array<i32>} : memref<64x1152xbf16, #tpu.memory_space<vmem>>, vector<64x128xbf16>,
    %c0_22 = arith.constant 0 : index
    %c3 = arith.constant 3 : index
    %c0_23 = arith.constant 0 : index
    %c0_24 = arith.constant 0 : index
    %c0_25 = arith.constant 0 : index
    %16 = vector.load %arg1[%c0_22, %c3, %c0_23, %c0_24, %c0_25] : memref<1x4x9x16x128xbf16, #tpu.memory_space<vmem>>, vector<1x1x8x8x128xbf16>
    %17 = vector.shape_cast %16 : vector<1x1x8x8x128xbf16> to vector<8x8x128xbf16>
    %18 = vector.shape_cast %17 : vector<8x8x128xbf16> to vector<64x128xbf16>
    %c0_26 = arith.constant 0 : index
    %c512 = arith.constant 512 : index
    %19 = vector.load %arg7[%c0_26, %c512] : memref<64x1152xbf16, #tpu.memory_space<vmem>>, vector<64x128xbf16>
    tpu.vector_store %arg7[%c0_26, %c512], %18 {strides = array<i32>} : memref<64x1152xbf16, #tpu.memory_space<vmem>>, vector<64x128xbf16>,
    %c0_27 = arith.constant 0 : index
    %c2_28 = arith.constant 2 : index
    %c0_29 = arith.constant 0 : index
    %c1_30 = arith.constant 1 : index
    %c0_31 = arith.constant 0 : index
    %20 = vector.load %arg1[%c0_27, %c2_28, %c0_29, %c1_30, %c0_31] : memref<1x4x9x16x128xbf16, #tpu.memory_space<vmem>>, vector<1x1x8x8x128xbf16>
    %21 = vector.shape_cast %20 : vector<1x1x8x8x128xbf16> to vector<8x8x128xbf16>
    %22 = vector.shape_cast %21 : vector<8x8x128xbf16> to vector<64x128xbf16>
    %c0_32 = arith.constant 0 : index
    %c640 = arith.constant 640 : index
    %23 = vector.load %arg7[%c0_32, %c640] : memref<64x1152xbf16, #tpu.memory_space<vmem>>, vector<64x128xbf16>
    tpu.vector_store %arg7[%c0_32, %c640], %22 {strides = array<i32>} : memref<64x1152xbf16, #tpu.memory_space<vmem>>, vector<64x128xbf16>,
    %c0_33 = arith.constant 0 : index
    %c0_34 = arith.constant 0 : index
    %c1_35 = arith.constant 1 : index
    %c0_36 = arith.constant 0 : index
    %c0_37 = arith.constant 0 : index
    %24 = vector.load %arg1[%c0_33, %c0_34, %c1_35, %c0_36, %c0_37] : memref<1x4x9x16x128xbf16, #tpu.memory_space<vmem>>, vector<1x1x8x8x128xbf16>
    %25 = vector.shape_cast %24 : vector<1x1x8x8x128xbf16> to vector<8x8x128xbf16>
    %26 = vector.shape_cast %25 : vector<8x8x128xbf16> to vector<64x128xbf16>
    %c0_38 = arith.constant 0 : index
    %c768 = arith.constant 768 : index
    %27 = vector.load %arg7[%c0_38, %c768] : memref<64x1152xbf16, #tpu.memory_space<vmem>>, vector<64x128xbf16>
    tpu.vector_store %arg7[%c0_38, %c768], %26 {strides = array<i32>} : memref<64x1152xbf16, #tpu.memory_space<vmem>>, vector<64x128xbf16>,
    %c0_39 = arith.constant 0 : index
    %c1_40 = arith.constant 1 : index
    %c1_41 = arith.constant 1 : index
    %c0_42 = arith.constant 0 : index
    %c0_43 = arith.constant 0 : index
    %28 = vector.load %arg1[%c0_39, %c1_40, %c1_41, %c0_42, %c0_43] : memref<1x4x9x16x128xbf16, #tpu.memory_space<vmem>>, vector<1x1x8x8x128xbf16>
    %29 = vector.shape_cast %28 : vector<1x1x8x8x128xbf16> to vector<8x8x128xbf16>
    %30 = vector.shape_cast %29 : vector<8x8x128xbf16> to vector<64x128xbf16>
    %c0_44 = arith.constant 0 : index
    %c896 = arith.constant 896 : index
    %31 = vector.load %arg7[%c0_44, %c896] : memref<64x1152xbf16, #tpu.memory_space<vmem>>, vector<64x128xbf16>
    tpu.vector_store %arg7[%c0_44, %c896], %30 {strides = array<i32>} : memref<64x1152xbf16, #tpu.memory_space<vmem>>, vector<64x128xbf16>,
    %c0_45 = arith.constant 0 : index
    %c0_46 = arith.constant 0 : index
    %c1_47 = arith.constant 1 : index
    %c1_48 = arith.constant 1 : index
    %c0_49 = arith.constant 0 : index
    %32 = vector.load %arg1[%c0_45, %c0_46, %c1_47, %c1_48, %c0_49] : memref<1x4x9x16x128xbf16, #tpu.memory_space<vmem>>, vector<1x1x8x8x128xbf16>
    %33 = vector.shape_cast %32 : vector<1x1x8x8x128xbf16> to vector<8x8x128xbf16>
    %34 = vector.shape_cast %33 : vector<8x8x128xbf16> to vector<64x128xbf16>
    %c0_50 = arith.constant 0 : index
    %c1024 = arith.constant 1024 : index
    %35 = vector.load %arg7[%c0_50, %c1024] : memref<64x1152xbf16, #tpu.memory_space<vmem>>, vector<64x128xbf16>
    tpu.vector_store %arg7[%c0_50, %c1024], %34 {strides = array<i32>} : memref<64x1152xbf16, #tpu.memory_space<vmem>>, vector<64x128xbf16>,
    %c0_51 = arith.constant 0 : index
    %c0_52 = arith.constant 0 : index
    %36 = vector.load %arg7[%c0_51, %c0_52] : memref<64x1152xbf16, #tpu.memory_space<vmem>>, vector<64x1152xbf16>
    %c0_53 = arith.constant 0 : index
    %c0_54 = arith.constant 0 : index
    %37 = vector.load %arg2[%c0_53, %c0_54] : memref<1152x128xbf16, #tpu.memory_space<vmem>>, vector<1152x128xbf16>
    %cst = arith.constant dense<0.000000e+00> : vector<64x128xf32>
    %38 = tpu.matmul %36, %37, %cst {dimension_numbers = #tpu.dot_dimension_numbers<[1], [0], [0], [1], [0, 0, 1, 1], [], []>} : vector<64x1152xbf16>, vector<1152x128xbf16>, vector<64x128xf32> -> vector<64x128xf32>
    %39 = vector.shape_cast %38 : vector<64x128xf32> to vector<1x8x8x128xf32>
    %40 = arith.truncf %39 : vector<1x8x8x128xf32> to vector<1x8x8x128xbf16>
    %c0_55 = arith.constant 0 : index
    %c0_56 = arith.constant 0 : index
    %c0_57 = arith.constant 0 : index
    %c0_58 = arith.constant 0 : index
    %41 = vector.load %arg4[%c0_55, %c0_56, %c0_57, %c0_58] : memref<1x8x8x128xbf16, #tpu.memory_space<vmem>>, vector<1x8x8x128xbf16>
    tpu.vector_store %arg4[%c0_55, %c0_56, %c0_57, %c0_58], %40 {strides = array<i32>} : memref<1x8x8x128xbf16, #tpu.memory_space<vmem>>, vector<1x8x8x128xbf16>,
    %cst_59 = arith.constant dense<0.000000e+00> : vector<128xf32>
    %42 = vector.multi_reduction <add>, %38, %cst_59 [0] : vector<64x128xf32> to vector<128xf32>
    %43 = vector.shape_cast %42 : vector<128xf32> to vector<1x128xf32>
    %44 = arith.mulf %38, %38 : vector<64x128xf32>
    %cst_60 = arith.constant dense<0.000000e+00> : vector<128xf32>
    %45 = vector.multi_reduction <add>, %44, %cst_60 [0] : vector<64x128xf32> to vector<128xf32>
    %46 = vector.shape_cast %45 : vector<128xf32> to vector<1x128xf32>
    %c0_61 = arith.constant 0 : index
    %c512_62 = arith.constant 512 : index
    %47 = vector.load %arg7[%c0_61, %c512_62] : memref<64x1152xbf16, #tpu.memory_space<vmem>>, vector<64x128xbf16>
    %c0_63 = arith.constant 0 : index
    %c0_64 = arith.constant 0 : index
    %48 = vector.load %arg3[%c0_63, %c0_64] : memref<128x128xbf16, #tpu.memory_space<vmem>>, vector<128x128xbf16>
    %cst_65 = arith.constant dense<0.000000e+00> : vector<64x128xf32>
    %49 = tpu.matmul %47, %48, %cst_65 {dimension_numbers = #tpu.dot_dimension_numbers<[1], [0], [0], [1], [0, 0, 1, 1], [], []>} : vector<64x128xbf16>, vector<128x128xbf16>, vector<64x128xf32> -> vector<64x128xf32>
    %50 = vector.shape_cast %49 : vector<64x128xf32> to vector<1x8x8x128xf32>
    %51 = arith.truncf %50 : vector<1x8x8x128xf32> to vector<1x8x8x128xbf16>
    %c0_66 = arith.constant 0 : index
    %c0_67 = arith.constant 0 : index
    %c0_68 = arith.constant 0 : index
    %c0_69 = arith.constant 0 : index
    %52 = vector.load %arg5[%c0_66, %c0_67, %c0_68, %c0_69] : memref<1x8x8x128xbf16, #tpu.memory_space<vmem>>, vector<1x8x8x128xbf16>
    tpu.vector_store %arg5[%c0_66, %c0_67, %c0_68, %c0_69], %51 {strides = array<i32>} : memref<1x8x8x128xbf16, #tpu.memory_space<vmem>>, vector<1x8x8x128xbf16>,
    %cst_70 = arith.constant dense<0.000000e+00> : vector<128xf32>
    %53 = vector.multi_reduction <add>, %49, %cst_70 [0] : vector<64x128xf32> to vector<128xf32>
    %54 = vector.shape_cast %53 : vector<128xf32> to vector<1x128xf32>
    %55 = arith.mulf %49, %49 : vector<64x128xf32>
    %cst_71 = arith.constant dense<0.000000e+00> : vector<128xf32>
    %56 = vector.multi_reduction <add>, %55, %cst_71 [0] : vector<64x128xf32> to vector<128xf32>
    %57 = vector.shape_cast %56 : vector<128xf32> to vector<1x128xf32>
    %58 = tpu.concatenate %43, %46, %54, %57 in 0 : vector<1x128xf32>, vector<1x128xf32>, vector<1x128xf32>, vector<1x128xf32> -> vector<4x128xf32>
    %c0_72 = arith.constant 0 : index
    %c0_73 = arith.constant 0 : index
    %c0_74 = arith.constant 0 : index
    %59 = vector.load %arg6[%c0_72, %c0_73, %c0_74] : memref<1x4x128xf32, #tpu.memory_space<vmem>>, vector<1x4x128xf32>
    %60 = vector.shape_cast %59 : vector<1x4x128xf32> to vector<4x128xf32>
    %61 = vector.shape_cast %58 : vector<4x128xf32> to vector<1x4x128xf32>
    tpu.vector_store %arg6[%c0_72, %c0_73, %c0_74], %61 {strides = array<i32>} : memref<1x4x128xf32, #tpu.memory_space<vmem>>, vector<1x4x128xf32>,
    return
  }
  func.func @transform_0(%arg0: i32) -> (i32, i32, i32, i32, i32) {
    %c0_i32 = arith.constant 0 : i32
    %c0_i32_0 = arith.constant 0 : i32
    %c0_i32_1 = arith.constant 0 : i32
    %c0_i32_2 = arith.constant 0 : i32
    %c0_i32_3 = arith.constant 0 : i32
    return %arg0, %c0_i32, %c0_i32_0, %c0_i32_1, %c0_i32_2 : i32, i32, i32, i32, i32
  }
  func.func @transform_1(%arg0: i32) -> (i32, i32) {
    %c0_i32 = arith.constant 0 : i32
    %c0_i32_0 = arith.constant 0 : i32
    %c0_i32_1 = arith.constant 0 : i32
    return %c0_i32, %c0_i32_0 : i32, i32
  }
  func.func @transform_2(%arg0: i32) -> (i32, i32) {
    %c0_i32 = arith.constant 0 : i32
    %c0_i32_0 = arith.constant 0 : i32
    %c0_i32_1 = arith.constant 0 : i32
    return %c0_i32, %c0_i32_0 : i32, i32
  }
  func.func @transform_3(%arg0: i32) -> (i32, i32, i32, i32) {
    %c0_i32 = arith.constant 0 : i32
    %c0_i32_0 = arith.constant 0 : i32
    %c0_i32_1 = arith.constant 0 : i32
    %c0_i32_2 = arith.constant 0 : i32
    return %arg0, %c0_i32, %c0_i32_0, %c0_i32_1 : i32, i32, i32, i32
  }
  func.func @transform_4(%arg0: i32) -> (i32, i32, i32, i32) {
    %c0_i32 = arith.constant 0 : i32
    %c0_i32_0 = arith.constant 0 : i32
    %c0_i32_1 = arith.constant 0 : i32
    %c0_i32_2 = arith.constant 0 : i32
    return %arg0, %c0_i32, %c0_i32_0, %c0_i32_1 : i32, i32, i32, i32
  }
  func.func @transform_5(%arg0: i32) -> (i32, i32, i32) {
    %c0_i32 = arith.constant 0 : i32
    %c0_i32_0 = arith.constant 0 : i32
    %c0_i32_1 = arith.constant 0 : i32
    return %arg0, %c0_i32, %c0_i32_0 : i32, i32, i32
  }
}

</mosaic_0001>

<llo_original>
// kernel: tpu_custom_call.1
$region0: #{tpu_custom_call.1}
  #allocation0 [shape = 'u32[]', space=smem, size = 0x4, offset = 0x4, fixed_abs, tag = 'smem constant byte address 0x4 - core index']
  #allocation1 [shape = 'u32[144,128]{1,0:T(1,128)}', space=vmem, size = 0x12000, scoped, tag = 'internal scratch']
  #allocation2 [shape = 'bf16[64,1152]{1,0:T(8,128)(2,1)}', space=vmem, size = 0x24000, scoped, tag = 'scratch operand']
  %s0 = inlined_call_operand.hbm [shape: bf16[2,4,9,16,128], index: 0, kind: input, shape index: {}]
  %s1 = inlined_call_operand.hbm [shape: bf16[1152,128], index: 1, kind: input, shape index: {}]
  %s2 = inlined_call_operand.hbm [shape: bf16[128,128], index: 2, kind: input, shape index: {}]
  %s3 = inlined_call_operand.hbm [shape: bf16[2,8,8,128], index: 3, kind: output, shape index: {0}]
  %s4 = inlined_call_operand.hbm [shape: bf16[2,8,8,128], index: 4, kind: output, shape index: {1}]
  %s5 = inlined_call_operand.hbm [shape: f32[2,4,128], index: 5, kind: output, shape index: {2}]
  %6 = xla_tuple %s3, %s4, %s5
  %s7 = sld [smem:[#allocation0]]
  $region73: #{tpu_custom_call.1} parent=0
    _
  %s9 = ssub.s32 1, %s7
  %s10 = scalar_select 0, %s9, %s7
  $region1: #{tpu_custom_call.1} parent=0
    #allocation3 [shape = 'u8[294912]{0}', space=vmem, size = 0x48000, scoped, tag = 'input window, operand 0']
    #allocation4 [shape = 's32[2]{0}', space=sflag, size = 0x8, scoped, tag = 'scoped memory for tpu_custom_call.1']
    #allocation5 [shape = 's32[2]{0}', space=sflag, size = 0x8, scoped, tag = 'scoped memory for tpu_custom_call.1']
    #allocation6 [shape = 'u8[294912]{0}', space=vmem, size = 0x48000, scoped, tag = 'input window, operand 1, single buffered']
    #allocation7 [shape = 's32[1]{0}', space=sflag, size = 0x4, scoped, tag = 'scoped memory for tpu_custom_call.1']
    #allocation8 [shape = 'u8[32768]{0}', space=vmem, size = 0x8000, scoped, tag = 'input window, operand 2, single buffered']
    #allocation9 [shape = 'u8[32768]{0}', space=vmem, size = 0x8000, scoped, tag = 'output window, operand 0']
    #allocation10 [shape = 'u8[32768]{0}', space=vmem, size = 0x8000, scoped, tag = 'output window, operand 1']
    #allocation11 [shape = 's32[2]{0}', space=sflag, size = 0x8, scoped, tag = 'scoped memory for tpu_custom_call.1']
    #allocation12 [shape = 'u8[4096]{0}', space=vmem, size = 0x1000, scoped, tag = 'output window, operand 2']
    %11 = vsyncpa [#allocation4], 0
    %s12 = scalar_lea.sflag [#allocation4], 1
    %13 = vsyncpa %s12, 0
    %14 = vsyncpa [#allocation7], 0
    %15 = vsyncpa [#allocation5], 0
    %s16 = scalar_lea.sflag [#allocation5], 1
    %17 = vsyncpa %s16, 0
    %18 = vsyncpa [#allocation11], 0
    %s19 = scalar_lea.sflag [#allocation11], 1
    %20 = vsyncpa %s19, 0
    loop: start=0, step=1, limit=4
    $region2: #{tpu_custom_call.1} parent=1 // loop_pre_header
      _
    $region3: #{tpu_custom_call.1} parent=1 // loop_header
      %s22 = sphi 0, %s26
      %p23 = scmp.ge.s32.totalorder %s22, 4
      %s32 = sphi 0, %s34
      %s35 = sphi 0, %s32
      %s36 = sphi 0, %s35
      %s52 = sphi 0, %s36
      %s56 = sphi 0, %s56
      %s58 = sphi 0, %s56
      %s59 = sphi 0, %s58
      %s73 = sphi 0, %s59
      %s77 = sphi 0, %s77
      %s79 = sphi 0, %s77
      %s80 = sphi 0, %s79
      %s94 = sphi 0, %s80
      %s100 = sphi 0, %s102
      %s103 = sphi 0, %s100
      %s104 = sphi 0, %s103
      %s120 = sphi 0, %s104
      %s126 = sphi 0, %s128
      %s129 = sphi 0, %s126
      %s130 = sphi 0, %s129
      %s146 = sphi 0, %s130
      %s152 = sphi 0, %s154
      %s155 = sphi 0, %s152
      %s156 = sphi 0, %s155
      %s172 = sphi 0, %s156
    $region4: #{tpu_custom_call.1} parent=1 // loop_header_branch
      %25 = sbr.rel (%p23) target = $region8
    $region5: #{tpu_custom_call.1} parent=1 // loop_body
      %s27 = ssub.s32 %s22, 1
      %s28 = ssub.s32 %s22, 2
      %s29 = sadd.s32 %s22, 1
      %s30 = ssub.s32 %s22, %s29
      %p31 = scmp.eq.s32.totalorder %s30, 0
      %s33 = sadd.s32 %s32, 1
      %s34 = scalar_select %p31, %s32, %s33
      %p37 = pneg %p31
      %p38 = scmp.eq.s32.totalorder %s22, 1
      %p39 = por %p37, %p38
      %p40 = scmp.ne.s32.totalorder %s32, %s35
      %p41 = scmp.eq.s32.totalorder %s22, 0
      %p42 = por %p40, %p41
      %p43 = scmp.ne.s32.totalorder %s32, %s35
      %p44 = scmp.eq.s32.totalorder %s27, 1
      %p45 = por %p43, %p44
      %p46 = scmp.ne.s32.totalorder %s35, %s36
      %p47 = scmp.eq.s32.totalorder %s27, 0
      %p48 = por %p46, %p47
      %p49 = scmp.ne.s32.totalorder %s35, %s36
      %p50 = scmp.eq.s32.totalorder %s28, 1
      %p51 = por %p49, %p50
      %p53 = scmp.ne.s32.totalorder %s36, %s52
      %p54 = scmp.eq.s32.totalorder %s28, 0
      %p55 = por %p53, %p54
      %s57 = sadd.s32 %s56, 1
      %p60 = scmp.eq.s32.totalorder %s22, 1
      %p61 = scmp.ne.s32.totalorder %s56, %s58
      %p62 = scmp.eq.s32.totalorder %s22, 0
      %p63 = por %p61, %p62
      %p64 = scmp.ne.s32.totalorder %s56, %s58
      %p65 = scmp.eq.s32.totalorder %s27, 1
      %p66 = por %p64, %p65
      %p67 = scmp.ne.s32.totalorder %s58, %s59
      %p68 = scmp.eq.s32.totalorder %s27, 0
      %p69 = por %p67, %p68
      %p70 = scmp.ne.s32.totalorder %s58, %s59
      %p71 = scmp.eq.s32.totalorder %s28, 1
      %p72 = por %p70, %p71
      %p74 = scmp.ne.s32.totalorder %s59, %s73
      %p75 = scmp.eq.s32.totalorder %s28, 0
      %p76 = por %p74, %p75
      %s78 = sadd.s32 %s77, 1
      %p81 = scmp.eq.s32.totalorder %s22, 1
      %p82 = scmp.ne.s32.totalorder %s77, %s79
      %p83 = scmp.eq.s32.totalorder %s22, 0
      %p84 = por %p82, %p83
      %p85 = scmp.ne.s32.totalorder %s77, %s79
      %p86 = scmp.eq.s32.totalorder %s27, 1
      %p87 = por %p85, %p86
      %p88 = scmp.ne.s32.totalorder %s79, %s80
      %p89 = scmp.eq.s32.totalorder %s27, 0
      %p90 = por %p88, %p89
      %p91 = scmp.ne.s32.totalorder %s79, %s80
      %p92 = scmp.eq.s32.totalorder %s28, 1
      %p93 = por %p91, %p92
      %p95 = scmp.ne.s32.totalorder %s80, %s94
      %p96 = scmp.eq.s32.totalorder %s28, 0
      %p97 = por %p95, %p96
      %s98 = ssub.s32 %s22, %s29
      %p99 = scmp.eq.s32.totalorder %s98, 0
      %s101 = sadd.s32 %s100, 1
      %s102 = scalar_select %p99, %s100, %s101
      %p105 = pneg %p99
      %p106 = scmp.eq.s32.totalorder %s22, 1
      %p107 = por %p105, %p106
      %p108 = scmp.ne.s32.totalorder %s100, %s103
      %p109 = scmp.eq.s32.totalorder %s22, 0
      %p110 = por %p108, %p109
      %p111 = scmp.ne.s32.totalorder %s100, %s103
      %p112 = scmp.eq.s32.totalorder %s27, 1
      %p113 = por %p111, %p112
      %p114 = scmp.ne.s32.totalorder %s103, %s104
      %p115 = scmp.eq.s32.totalorder %s27, 0
      %p116 = por %p114, %p115
      %p117 = scmp.ne.s32.totalorder %s103, %s104
      %p118 = scmp.eq.s32.totalorder %s28, 1
      %p119 = por %p117, %p118
      %p121 = scmp.ne.s32.totalorder %s104, %s120
      %p122 = scmp.eq.s32.totalorder %s28, 0
      %p123 = por %p121, %p122
      %s124 = ssub.s32 %s22, %s29
      %p125 = scmp.eq.s32.totalorder %s124, 0
      %s127 = sadd.s32 %s126, 1
      %s128 = scalar_select %p125, %s126, %s127
      %p131 = pneg %p125
      %p132 = scmp.eq.s32.totalorder %s22, 1
      %p133 = por %p131, %p132
      %p134 = scmp.ne.s32.totalorder %s126, %s129
      %p135 = scmp.eq.s32.totalorder %s22, 0
      %p136 = por %p134, %p135
      %p137 = scmp.ne.s32.totalorder %s126, %s129
      %p138 = scmp.eq.s32.totalorder %s27, 1
      %p139 = por %p137, %p138
      %p140 = scmp.ne.s32.totalorder %s129, %s130
      %p141 = scmp.eq.s32.totalorder %s27, 0
      %p142 = por %p140, %p141
      %p143 = scmp.ne.s32.totalorder %s129, %s130
      %p144 = scmp.eq.s32.totalorder %s28, 1
      %p145 = por %p143, %p144
      %p147 = scmp.ne.s32.totalorder %s130, %s146
      %p148 = scmp.eq.s32.totalorder %s28, 0
      %p149 = por %p147, %p148
      %s150 = ssub.s32 %s22, %s29
      %p151 = scmp.eq.s32.totalorder %s150, 0
      %s153 = sadd.s32 %s152, 1
      %s154 = scalar_select %p151, %s152, %s153
      %p157 = pneg %p151
      %p158 = scmp.eq.s32.totalorder %s22, 1
      %p159 = por %p157, %p158
      %p160 = scmp.ne.s32.totalorder %s152, %s155
      %p161 = scmp.eq.s32.totalorder %s22, 0
      %p162 = por %p160, %p161
      %p163 = scmp.ne.s32.totalorder %s152, %s155
      %p164 = scmp.eq.s32.totalorder %s27, 1
      %p165 = por %p163, %p164
      %p166 = scmp.ne.s32.totalorder %s155, %s156
      %p167 = scmp.eq.s32.totalorder %s27, 0
      %p168 = por %p166, %p167
      %p169 = scmp.ne.s32.totalorder %s155, %s156
      %p170 = scmp.eq.s32.totalorder %s28, 1
      %p171 = por %p169, %p170
      %p173 = scmp.ne.s32.totalorder %s156, %s172
      %p174 = scmp.eq.s32.totalorder %s28, 0
      %p175 = por %p173, %p174
      %p176 = scmp.le.s32.totalorder 1, %s22
      %p177 = scmp.lt.s32.totalorder %s22, 3
      %p178 = pnand %p176, %p177
      %p179 = pneg %p178
      // Predicated region
      $region9: #{tpu_custom_call.1} parent=5 // pred_check
        _
      $region10: #{tpu_custom_call.1} parent=5 // pred_check_branch
        %181 = sbr.rel (%p178) target = $region12
      $region11: #{tpu_custom_call.1} parent=5 // pred_region
        %s182 = ssub.s32 %s22, 1
        // Predicated region
        $region13: #{tpu_custom_call.1} parent=11 // pred_check
          %p183 = pneg %p69
        $region14: #{tpu_custom_call.1} parent=11 // pred_check_branch
          %185 = sbr.rel (%p183) target = $region16
        $region15: #{tpu_custom_call.1} parent=11 // pred_region
          %s187 = ssub.s32 9216, 9216
          %188 = vsyncadd [#allocation7], %s187
          %s189 = sshll.u32 [#allocation6], 4
          %s190 = int_to_ptr.vmem [resolvable:$true] %s189
          %195 = dma.hbm_to_vmem [thread:$0]  %s1, 9216, %s190, [#allocation7], 64, 64, 4
        $region16: #{tpu_custom_call.1} parent=11 // pred_fallthru
          _
        // Predicated region
        $region17: #{tpu_custom_call.1} parent=11 // pred_check
          %p196 = pneg %p90
        $region18: #{tpu_custom_call.1} parent=11 // pred_check_branch
          %198 = sbr.rel (%p196) target = $region20
        $region19: #{tpu_custom_call.1} parent=11 // pred_region
          %s200 = ssub.s32 1024, 1024
          %201 = vsyncadd [#allocation7], %s200
          %s202 = sshll.u32 [#allocation8], 4
          %s203 = int_to_ptr.vmem [resolvable:$true] %s202
          %208 = dma.hbm_to_vmem [thread:$0]  %s2, 1024, %s203, [#allocation7], 64, 64, 4
        $region20: #{tpu_custom_call.1} parent=11 // pred_fallthru
          _
      $region12: #{tpu_custom_call.1} parent=5 // pred_fallthru
        _
      %p209 = scmp.lt.s32.totalorder %s22, 2
      // Predicated region
      $region21: #{tpu_custom_call.1} parent=5 // pred_check
        %p210 = pneg %p209
      $region22: #{tpu_custom_call.1} parent=5 // pred_check_branch
        %212 = sbr.rel (%p210) target = $region24
      $region23: #{tpu_custom_call.1} parent=5 // pred_region
        // Predicated region
        $region25: #{tpu_custom_call.1} parent=23 // pred_check
          %p213 = pneg %p42
        $region26: #{tpu_custom_call.1} parent=23 // pred_check_branch
          %215 = sbr.rel (%p213) target = $region28
        $region27: #{tpu_custom_call.1} parent=23 // pred_region
          %s216 = sand.u32 %s32, 1
          %s217 = scalar_lea.sflag [#allocation4], %s216
          %s218 = sand.u32 %s32, 1
          %s219 = smul.addr %s218, 288
          %s220 = scalar_lea.vmem [#allocation3], %s219
          %s222 = ssub.s32 4608, 4608
          %223 = vsyncadd %s217, %s222
          %s224 = smul.addr %s22, 72
          %s225 = smul.addr %s224, 64
          %s226 = scalar_lea.hbm %s0, %s225
          %s227 = sshll.u32 %s220, 4
          %s228 = int_to_ptr.vmem [resolvable:$true] %s227
          %233 = dma.hbm_to_vmem [thread:$0]  %s226, 4608, %s228, %s217, 64, 64, 4
        $region28: #{tpu_custom_call.1} parent=23 // pred_fallthru
          _
      $region24: #{tpu_custom_call.1} parent=5 // pred_fallthru
        _
      %p234 = scmp.le.s32.totalorder 1, %s22
      %p235 = scmp.lt.s32.totalorder %s22, 3
      %p236 = pnand %p234, %p235
      %p237 = pneg %p236
      // Predicated region
      $region29: #{tpu_custom_call.1} parent=5 // pred_check
        _
      $region30: #{tpu_custom_call.1} parent=5 // pred_check_branch
        %239 = sbr.rel (%p236) target = $region32
      $region31: #{tpu_custom_call.1} parent=5 // pred_region
        %s240 = ssub.s32 %s22, 1
        %s241 = sand.u32 %s35, 1
        %s242 = scalar_lea.sflag [#allocation4], %s241
        %s243 = sand.u32 %s35, 1
        %s244 = smul.addr %s243, 288
        %s245 = scalar_lea.vmem [#allocation3], %s244
        // Predicated region
        $region33: #{tpu_custom_call.1} parent=31 // pred_check
          %p246 = pneg %p48
        $region34: #{tpu_custom_call.1} parent=31 // pred_check_branch
          %248 = sbr.rel (%p246) target = $region36
        $region35: #{tpu_custom_call.1} parent=31 // pred_region
          %249 = dma.done %s242, 4608
        $region36: #{tpu_custom_call.1} parent=31 // pred_fallthru
          _
        // Predicated region
        $region37: #{tpu_custom_call.1} parent=31 // pred_check
          %p250 = pneg %p69
        $region38: #{tpu_custom_call.1} parent=31 // pred_check_branch
          %252 = sbr.rel (%p250) target = $region40
        $region39: #{tpu_custom_call.1} parent=31 // pred_region
          %253 = dma.done [#allocation7], 9216
        $region40: #{tpu_custom_call.1} parent=31 // pred_fallthru
          _
        // Predicated region
        $region41: #{tpu_custom_call.1} parent=31 // pred_check
          %p254 = pneg %p90
        $region42: #{tpu_custom_call.1} parent=31 // pred_check_branch
          %256 = sbr.rel (%p254) target = $region44
        $region43: #{tpu_custom_call.1} parent=31 // pred_region
          %257 = dma.done [#allocation7], 1024
        $region44: #{tpu_custom_call.1} parent=31 // pred_fallthru
          _
        %s258 = sand.u32 %s35, 1
        %s259 = scalar_lea.sflag [#allocation4], %s258
        %s260 = sand.u32 %s35, 1
        %s261 = smul.addr %s260, 288
        %s262 = scalar_lea.vmem [#allocation3], %s261
        %p263 = pneg %p48
        %p264 = pneg %p45
        %p265 = pneg %p69
        %p266 = pneg %p66
        %p267 = pneg %p90
        %p268 = pneg %p87
        %p269 = pneg %p116
        %p270 = pneg %p113
        %s271 = sand.u32 %s103, 1
        %s272 = scalar_lea.sflag [#allocation5], %s271
        %s273 = sand.u32 %s103, 1
        %s274 = smul.addr %s273, 32
        %s275 = scalar_lea.vmem [#allocation9], %s274
        %p276 = pneg %p142
        %p277 = pneg %p139
        %s278 = sand.u32 %s27, 1
        %s279 = scalar_lea.sflag [#allocation11], %s278
        %s280 = sand.u32 %s129, 1
        %s281 = smul.addr %s280, 32
        %s282 = scalar_lea.vmem [#allocation10], %s281
        %p283 = pneg %p168
        %p284 = pneg %p165
        %s285 = sand.u32 %s27, 1
        %s286 = scalar_lea.sflag [#allocation11], %s285
        %s287 = sand.u32 %s155, 1
        %s288 = smul.addr %s287, 4
        %s289 = scalar_lea.vmem [#allocation12], %s288
        %v291 = vld [vmem:[%s245] sm:$0xf]
        %v292 = vld [vmem:[%s245 + $0x8] sm:$0xf]
        %v293 = vld [vmem:[%s245 + $0x10] sm:$0xf]
        %v294 = vld [vmem:[%s245 + $0x18] sm:$0xf]
        %v295 = vld [vmem:[%s245 + $0x20] sm:$0xf]
        %v296 = vld [vmem:[%s245 + $0x28] sm:$0xf]
        %v297 = vld [vmem:[%s245 + $0x30] sm:$0xf]
        %v298 = vld [vmem:[%s245 + $0x38] sm:$0xf]
        %299 = vst [vmem:[#allocation2] sm:$0xf] %v291
        %300 = vst [vmem:[#allocation2 + $0x24] sm:$0xf] %v292
        %301 = vst [vmem:[#allocation2 + $0x48] sm:$0xf] %v293
        %302 = vst [vmem:[#allocation2 + $0x6c] sm:$0xf] %v294
        %303 = vst [vmem:[#allocation2 + $0x90] sm:$0xf] %v295
        %304 = vst [vmem:[#allocation2 + $0xb4] sm:$0xf] %v296
        %305 = vst [vmem:[#allocation2 + $0xd8] sm:$0xf] %v297
        %306 = vst [vmem:[#allocation2 + $0xfc] sm:$0xf] %v298
        %s307 = scalar_lea.vmem %s245, 72 [#allocation3]
        %v308 = vld [vmem:[%s307] sm:$0xf]
        %v309 = vld [vmem:[%s307 + $0x8] sm:$0xf]
        %v310 = vld [vmem:[%s307 + $0x10] sm:$0xf]
        %v311 = vld [vmem:[%s307 + $0x18] sm:$0xf]
        %v312 = vld [vmem:[%s307 + $0x20] sm:$0xf]
        %v313 = vld [vmem:[%s307 + $0x28] sm:$0xf]
        %v314 = vld [vmem:[%s307 + $0x30] sm:$0xf]
        %v315 = vld [vmem:[%s307 + $0x38] sm:$0xf]
        %316 = vst [vmem:[#allocation2 + $0x4] sm:$0xf] %v308
        %317 = vst [vmem:[#allocation2 + $0x28] sm:$0xf] %v309
        %318 = vst [vmem:[#allocation2 + $0x4c] sm:$0xf] %v310
        %319 = vst [vmem:[#allocation2 + $0x70] sm:$0xf] %v311
        %320 = vst [vmem:[#allocation2 + $0x94] sm:$0xf] %v312
        %321 = vst [vmem:[#allocation2 + $0xb8] sm:$0xf] %v313
        %322 = vst [vmem:[#allocation2 + $0xdc] sm:$0xf] %v314
        %323 = vst [vmem:[#allocation2 + $0x100] sm:$0xf] %v315
        %v324 = vld [vmem:[%s245] sm:$0xf]
        %v325 = vld [vmem:[%s245 + $0x4] sm:$0x1]
        %v326 = vld [vmem:[%s245 + $0x8] sm:$0xf]
        %v327 = vld [vmem:[%s245 + $0xc] sm:$0x1]
        %v328 = vld [vmem:[%s245 + $0x10] sm:$0xf]
        %v329 = vld [vmem:[%s245 + $0x14] sm:$0x1]
        %v330 = vld [vmem:[%s245 + $0x18] sm:$0xf]
        %v331 = vld [vmem:[%s245 + $0x1c] sm:$0x1]
        %v332 = vld [vmem:[%s245 + $0x20] sm:$0xf]
        %v333 = vld [vmem:[%s245 + $0x24] sm:$0x1]
        %v334 = vld [vmem:[%s245 + $0x28] sm:$0xf]
        %v335 = vld [vmem:[%s245 + $0x2c] sm:$0x1]
        %v336 = vld [vmem:[%s245 + $0x30] sm:$0xf]
        %v337 = vld [vmem:[%s245 + $0x34] sm:$0x1]
        %v338 = vld [vmem:[%s245 + $0x38] sm:$0xf]
        %v339 = vld [vmem:[%s245 + $0x3c] sm:$0x1]
        %vm340 = vsmask.f32 3328
        %vm341 = vsmask.f32 7440
        %vm342 = vmor %vm340, %vm341
        %v344 = vshrl.u32 %v324, 16
        %v346 = vrot.slane %v344, 4
        %v347 = vshll.u32 %v324, 16
        %v349 = vrot.slane %v347, 5
        %v350 = vor.u32 %v346, %v349
        %v351 = vrot.slane %v350, 4
        %v353 = vshll.u32 %v325, 16
        %v355 = vrot.slane %v353, 5
        %v356 = vsel %vm342, %v351, %v355
        %v358 = vshrl.u32 %v326, 16
        %v360 = vrot.slane %v358, 4
        %v361 = vshll.u32 %v326, 16
        %v363 = vrot.slane %v361, 5
        %v364 = vor.u32 %v360, %v363
        %v365 = vrot.slane %v364, 4
        %v367 = vshll.u32 %v327, 16
        %v369 = vrot.slane %v367, 5
        %v370 = vsel %vm342, %v365, %v369
        %v372 = vshrl.u32 %v328, 16
        %v374 = vrot.slane %v372, 4
        %v375 = vshll.u32 %v328, 16
        %v377 = vrot.slane %v375, 5
        %v378 = vor.u32 %v374, %v377
        %v379 = vrot.slane %v378, 4
        %v381 = vshll.u32 %v329, 16
        %v383 = vrot.slane %v381, 5
        %v384 = vsel %vm342, %v379, %v383
        %v386 = vshrl.u32 %v330, 16
        %v388 = vrot.slane %v386, 4
        %v389 = vshll.u32 %v330, 16
        %v391 = vrot.slane %v389, 5
        %v392 = vor.u32 %v388, %v391
        %v393 = vrot.slane %v392, 4
        %v395 = vshll.u32 %v331, 16
        %v397 = vrot.slane %v395, 5
        %v398 = vsel %vm342, %v393, %v397
        %v400 = vshrl.u32 %v332, 16
        %v402 = vrot.slane %v400, 4
        %v403 = vshll.u32 %v332, 16
        %v405 = vrot.slane %v403, 5
        %v406 = vor.u32 %v402, %v405
        %v407 = vrot.slane %v406, 4
        %v409 = vshll.u32 %v333, 16
        %v411 = vrot.slane %v409, 5
        %v412 = vsel %vm342, %v407, %v411
        %v414 = vshrl.u32 %v334, 16
        %v416 = vrot.slane %v414, 4
        %v417 = vshll.u32 %v334, 16
        %v419 = vrot.slane %v417, 5
        %v420 = vor.u32 %v416, %v419
        %v421 = vrot.slane %v420, 4
        %v423 = vshll.u32 %v335, 16
        %v425 = vrot.slane %v423, 5
        %v426 = vsel %vm342, %v421, %v425
        %v428 = vshrl.u32 %v336, 16
        %v430 = vrot.slane %v428, 4
        %v431 = vshll.u32 %v336, 16
        %v433 = vrot.slane %v431, 5
        %v434 = vor.u32 %v430, %v433
        %v435 = vrot.slane %v434, 4
        %v437 = vshll.u32 %v337, 16
        %v439 = vrot.slane %v437, 5
        %v440 = vsel %vm342, %v435, %v439
        %v442 = vshrl.u32 %v338, 16
        %v444 = vrot.slane %v442, 4
        %v445 = vshll.u32 %v338, 16
        %v447 = vrot.slane %v445, 5
        %v448 = vor.u32 %v444, %v447
        %v449 = vrot.slane %v448, 4
        %v451 = vshll.u32 %v339, 16
        %v453 = vrot.slane %v451, 5
        %v454 = vsel %vm342, %v449, %v453
        %463 = vst [vmem:[#allocation2 + $0x8] sm:$0xf] %v356
        %464 = vst [vmem:[#allocation2 + $0x2c] sm:$0xf] %v370
        %465 = vst [vmem:[#allocation2 + $0x50] sm:$0xf] %v384
        %466 = vst [vmem:[#allocation2 + $0x74] sm:$0xf] %v398
        %467 = vst [vmem:[#allocation2 + $0x98] sm:$0xf] %v412
        %468 = vst [vmem:[#allocation2 + $0xbc] sm:$0xf] %v426
        %469 = vst [vmem:[#allocation2 + $0xe0] sm:$0xf] %v440
        %470 = vst [vmem:[#allocation2 + $0x104] sm:$0xf] %v454
        %s471 = scalar_lea.vmem %s245, 144 [#allocation3]
        %v472 = vld [vmem:[%s471] sm:$0xf]
        %v473 = vld [vmem:[%s471 + $0x8] sm:$0xf]
        %v474 = vld [vmem:[%s471 + $0x10] sm:$0xf]
        %v475 = vld [vmem:[%s471 + $0x18] sm:$0xf]
        %v476 = vld [vmem:[%s471 + $0x20] sm:$0xf]
        %v477 = vld [vmem:[%s471 + $0x28] sm:$0xf]
        %v478 = vld [vmem:[%s471 + $0x30] sm:$0xf]
        %v479 = vld [vmem:[%s471 + $0x38] sm:$0xf]
        %480 = vst [vmem:[#allocation2 + $0xc] sm:$0xf] %v472
        %481 = vst [vmem:[#allocation2 + $0x30] sm:$0xf] %v473
        %482 = vst [vmem:[#allocation2 + $0x54] sm:$0xf] %v474
        %483 = vst [vmem:[#allocation2 + $0x78] sm:$0xf] %v475
        %484 = vst [vmem:[#allocation2 + $0x9c] sm:$0xf] %v476
        %485 = vst [vmem:[#allocation2 + $0xc0] sm:$0xf] %v477
        %486 = vst [vmem:[#allocation2 + $0xe4] sm:$0xf] %v478
        %487 = vst [vmem:[#allocation2 + $0x108] sm:$0xf] %v479
        %s488 = scalar_lea.vmem %s245, 216 [#allocation3]
        %v489 = vld [vmem:[%s488] sm:$0xf]
        %v490 = vld [vmem:[%s488 + $0x8] sm:$0xf]
        %v491 = vld [vmem:[%s488 + $0x10] sm:$0xf]
        %v492 = vld [vmem:[%s488 + $0x18] sm:$0xf]
        %v493 = vld [vmem:[%s488 + $0x20] sm:$0xf]
        %v494 = vld [vmem:[%s488 + $0x28] sm:$0xf]
        %v495 = vld [vmem:[%s488 + $0x30] sm:$0xf]
        %v496 = vld [vmem:[%s488 + $0x38] sm:$0xf]
        %497 = vst [vmem:[#allocation2 + $0x10] sm:$0xf] %v489
        %498 = vst [vmem:[#allocation2 + $0x34] sm:$0xf] %v490
        %499 = vst [vmem:[#allocation2 + $0x58] sm:$0xf] %v491
        %500 = vst [vmem:[#allocation2 + $0x7c] sm:$0xf] %v492
        %501 = vst [vmem:[#allocation2 + $0xa0] sm:$0xf] %v493
        %502 = vst [vmem:[#allocation2 + $0xc4] sm:$0xf] %v494
        %503 = vst [vmem:[#allocation2 + $0xe8] sm:$0xf] %v495
        %504 = vst [vmem:[#allocation2 + $0x10c] sm:$0xf] %v496
        %v505 = vld [vmem:[%s471] sm:$0xf]
        %v506 = vld [vmem:[%s471 + $0x4] sm:$0x1]
        %v507 = vld [vmem:[%s471 + $0x8] sm:$0xf]
        %v508 = vld [vmem:[%s471 + $0xc] sm:$0x1]
        %v509 = vld [vmem:[%s471 + $0x10] sm:$0xf]
        %v510 = vld [vmem:[%s471 + $0x14] sm:$0x1]
        %v511 = vld [vmem:[%s471 + $0x18] sm:$0xf]
        %v512 = vld [vmem:[%s471 + $0x1c] sm:$0x1]
        %v513 = vld [vmem:[%s471 + $0x20] sm:$0xf]
        %v514 = vld [vmem:[%s471 + $0x24] sm:$0x1]
        %v515 = vld [vmem:[%s471 + $0x28] sm:$0xf]
        %v516 = vld [vmem:[%s471 + $0x2c] sm:$0x1]
        %v517 = vld [vmem:[%s471 + $0x30] sm:$0xf]
        %v518 = vld [vmem:[%s471 + $0x34] sm:$0x1]
        %v519 = vld [vmem:[%s471 + $0x38] sm:$0xf]
        %v520 = vld [vmem:[%s471 + $0x3c] sm:$0x1]
        %v522 = vshrl.u32 %v505, 16
        %v524 = vrot.slane %v522, 4
        %v525 = vshll.u32 %v505, 16
        %v527 = vrot.slane %v525, 5
        %v528 = vor.u32 %v524, %v527
        %v529 = vrot.slane %v528, 4
        %v531 = vshll.u32 %v506, 16
        %v533 = vrot.slane %v531, 5
        %v534 = vsel %vm342, %v529, %v533
        %v536 = vshrl.u32 %v507, 16
        %v538 = vrot.slane %v536, 4
        %v539 = vshll.u32 %v507, 16
        %v541 = vrot.slane %v539, 5
        %v542 = vor.u32 %v538, %v541
        %v543 = vrot.slane %v542, 4
        %v545 = vshll.u32 %v508, 16
        %v547 = vrot.slane %v545, 5
        %v548 = vsel %vm342, %v543, %v547
        %v550 = vshrl.u32 %v509, 16
        %v552 = vrot.slane %v550, 4
        %v553 = vshll.u32 %v509, 16
        %v555 = vrot.slane %v553, 5
        %v556 = vor.u32 %v552, %v555
        %v557 = vrot.slane %v556, 4
        %v559 = vshll.u32 %v510, 16
        %v561 = vrot.slane %v559, 5
        %v562 = vsel %vm342, %v557, %v561
        %v564 = vshrl.u32 %v511, 16
        %v566 = vrot.slane %v564, 4
        %v567 = vshll.u32 %v511, 16
        %v569 = vrot.slane %v567, 5
        %v570 = vor.u32 %v566, %v569
        %v571 = vrot.slane %v570, 4
        %v573 = vshll.u32 %v512, 16
        %v575 = vrot.slane %v573, 5
        %v576 = vsel %vm342, %v571, %v575
        %v578 = vshrl.u32 %v513, 16
        %v580 = vrot.slane %v578, 4
        %v581 = vshll.u32 %v513, 16
        %v583 = vrot.slane %v581, 5
        %v584 = vor.u32 %v580, %v583
        %v585 = vrot.slane %v584, 4
        %v587 = vshll.u32 %v514, 16
        %v589 = vrot.slane %v587, 5
        %v590 = vsel %vm342, %v585, %v589
        %v592 = vshrl.u32 %v515, 16
        %v594 = vrot.slane %v592, 4
        %v595 = vshll.u32 %v515, 16
        %v597 = vrot.slane %v595, 5
        %v598 = vor.u32 %v594, %v597
        %v599 = vrot.slane %v598, 4
        %v601 = vshll.u32 %v516, 16
        %v603 = vrot.slane %v601, 5
        %v604 = vsel %vm342, %v599, %v603
        %v606 = vshrl.u32 %v517, 16
        %v608 = vrot.slane %v606, 4
        %v609 = vshll.u32 %v517, 16
        %v611 = vrot.slane %v609, 5
        %v612 = vor.u32 %v608, %v611
        %v613 = vrot.slane %v612, 4
        %v615 = vshll.u32 %v518, 16
        %v617 = vrot.slane %v615, 5
        %v618 = vsel %vm342, %v613, %v617
        %v620 = vshrl.u32 %v519, 16
        %v622 = vrot.slane %v620, 4
        %v623 = vshll.u32 %v519, 16
        %v625 = vrot.slane %v623, 5
        %v626 = vor.u32 %v622, %v625
        %v627 = vrot.slane %v626, 4
        %v629 = vshll.u32 %v520, 16
        %v631 = vrot.slane %v629, 5
        %v632 = vsel %vm342, %v627, %v631
        %641 = vst [vmem:[#allocation2 + $0x14] sm:$0xf] %v534
        %642 = vst [vmem:[#allocation2 + $0x38] sm:$0xf] %v548
        %643 = vst [vmem:[#allocation2 + $0x5c] sm:$0xf] %v562
        %644 = vst [vmem:[#allocation2 + $0x80] sm:$0xf] %v576
        %645 = vst [vmem:[#allocation2 + $0xa4] sm:$0xf] %v590
        %646 = vst [vmem:[#allocation2 + $0xc8] sm:$0xf] %v604
        %647 = vst [vmem:[#allocation2 + $0xec] sm:$0xf] %v618
        %648 = vst [vmem:[#allocation2 + $0x110] sm:$0xf] %v632
        %s649 = scalar_lea.vmem %s245, 8 [#allocation3]
        %v650 = vld [vmem:[%s649] sm:$0xf]
        %v651 = vld [vmem:[%s649 + $0x8] sm:$0xf]
        %v652 = vld [vmem:[%s649 + $0x10] sm:$0xf]
        %v653 = vld [vmem:[%s649 + $0x18] sm:$0xf]
        %v654 = vld [vmem:[%s649 + $0x20] sm:$0xf]
        %v655 = vld [vmem:[%s649 + $0x28] sm:$0xf]
        %v656 = vld [vmem:[%s649 + $0x30] sm:$0xf]
        %v657 = vld [vmem:[%s649 + $0x38] sm:$0xf]
        %658 = vst [vmem:[#allocation2 + $0x18] sm:$0xf] %v650
        %659 = vst [vmem:[#allocation2 + $0x3c] sm:$0xf] %v651
        %660 = vst [vmem:[#allocation2 + $0x60] sm:$0xf] %v652
        %661 = vst [vmem:[#allocation2 + $0x84] sm:$0xf] %v653
        %662 = vst [vmem:[#allocation2 + $0xa8] sm:$0xf] %v654
        %663 = vst [vmem:[#allocation2 + $0xcc] sm:$0xf] %v655
        %664 = vst [vmem:[#allocation2 + $0xf0] sm:$0xf] %v656
        %665 = vst [vmem:[#allocation2 + $0x114] sm:$0xf] %v657
        %s666 = scalar_lea.vmem %s245, 80 [#allocation3]
        %v667 = vld [vmem:[%s666] sm:$0xf]
        %v668 = vld [vmem:[%s666 + $0x8] sm:$0xf]
        %v669 = vld [vmem:[%s666 + $0x10] sm:$0xf]
        %v670 = vld [vmem:[%s666 + $0x18] sm:$0xf]
        %v671 = vld [vmem:[%s666 + $0x20] sm:$0xf]
        %v672 = vld [vmem:[%s666 + $0x28] sm:$0xf]
        %v673 = vld [vmem:[%s666 + $0x30] sm:$0xf]
        %v674 = vld [vmem:[%s666 + $0x38] sm:$0xf]
        %675 = vst [vmem:[#allocation2 + $0x1c] sm:$0xf] %v667
        %676 = vst [vmem:[#allocation2 + $0x40] sm:$0xf] %v668
        %677 = vst [vmem:[#allocation2 + $0x64] sm:$0xf] %v669
        %678 = vst [vmem:[#allocation2 + $0x88] sm:$0xf] %v670
        %679 = vst [vmem:[#allocation2 + $0xac] sm:$0xf] %v671
        %680 = vst [vmem:[#allocation2 + $0xd0] sm:$0xf] %v672
        %681 = vst [vmem:[#allocation2 + $0xf4] sm:$0xf] %v673
        %682 = vst [vmem:[#allocation2 + $0x118] sm:$0xf] %v674
        %v683 = vld [vmem:[%s649] sm:$0xf]
        %v684 = vld [vmem:[%s649 + $0x4] sm:$0x1]
        %v685 = vld [vmem:[%s649 + $0x8] sm:$0xf]
        %v686 = vld [vmem:[%s649 + $0xc] sm:$0x1]
        %v687 = vld [vmem:[%s649 + $0x10] sm:$0xf]
        %v688 = vld [vmem:[%s649 + $0x14] sm:$0x1]
        %v689 = vld [vmem:[%s649 + $0x18] sm:$0xf]
        %v690 = vld [vmem:[%s649 + $0x1c] sm:$0x1]
        %v691 = vld [vmem:[%s649 + $0x20] sm:$0xf]
        %v692 = vld [vmem:[%s649 + $0x24] sm:$0x1]
        %v693 = vld [vmem:[%s649 + $0x28] sm:$0xf]
        %v694 = vld [vmem:[%s649 + $0x2c] sm:$0x1]
        %v695 = vld [vmem:[%s649 + $0x30] sm:$0xf]
        %v696 = vld [vmem:[%s649 + $0x34] sm:$0x1]
        %v697 = vld [vmem:[%s649 + $0x38] sm:$0xf]
        %v698 = vld [vmem:[%s649 + $0x3c] sm:$0x1]
        %v700 = vshrl.u32 %v683, 16
        %v702 = vrot.slane %v700, 4
        %v703 = vshll.u32 %v683, 16
        %v705 = vrot.slane %v703, 5
        %v706 = vor.u32 %v702, %v705
        %v707 = vrot.slane %v706, 4
        %v709 = vshll.u32 %v684, 16
        %v711 = vrot.slane %v709, 5
        %v712 = vsel %vm342, %v707, %v711
        %v714 = vshrl.u32 %v685, 16
        %v716 = vrot.slane %v714, 4
        %v717 = vshll.u32 %v685, 16
        %v719 = vrot.slane %v717, 5
        %v720 = vor.u32 %v716, %v719
        %v721 = vrot.slane %v720, 4
        %v723 = vshll.u32 %v686, 16
        %v725 = vrot.slane %v723, 5
        %v726 = vsel %vm342, %v721, %v725
        %v728 = vshrl.u32 %v687, 16
        %v730 = vrot.slane %v728, 4
        %v731 = vshll.u32 %v687, 16
        %v733 = vrot.slane %v731, 5
        %v734 = vor.u32 %v730, %v733
        %v735 = vrot.slane %v734, 4
        %v737 = vshll.u32 %v688, 16
        %v739 = vrot.slane %v737, 5
        %v740 = vsel %vm342, %v735, %v739
        %v742 = vshrl.u32 %v689, 16
        %v744 = vrot.slane %v742, 4
        %v745 = vshll.u32 %v689, 16
        %v747 = vrot.slane %v745, 5
        %v748 = vor.u32 %v744, %v747
        %v749 = vrot.slane %v748, 4
        %v751 = vshll.u32 %v690, 16
        %v753 = vrot.slane %v751, 5
        %v754 = vsel %vm342, %v749, %v753
        %v756 = vshrl.u32 %v691, 16
        %v758 = vrot.slane %v756, 4
        %v759 = vshll.u32 %v691, 16
        %v761 = vrot.slane %v759, 5
        %v762 = vor.u32 %v758, %v761
        %v763 = vrot.slane %v762, 4
        %v765 = vshll.u32 %v692, 16
        %v767 = vrot.slane %v765, 5
        %v768 = vsel %vm342, %v763, %v767
        %v770 = vshrl.u32 %v693, 16
        %v772 = vrot.slane %v770, 4
        %v773 = vshll.u32 %v693, 16
        %v775 = vrot.slane %v773, 5
        %v776 = vor.u32 %v772, %v775
        %v777 = vrot.slane %v776, 4
        %v779 = vshll.u32 %v694, 16
        %v781 = vrot.slane %v779, 5
        %v782 = vsel %vm342, %v777, %v781
        %v784 = vshrl.u32 %v695, 16
        %v786 = vrot.slane %v784, 4
        %v787 = vshll.u32 %v695, 16
        %v789 = vrot.slane %v787, 5
        %v790 = vor.u32 %v786, %v789
        %v791 = vrot.slane %v790, 4
        %v793 = vshll.u32 %v696, 16
        %v795 = vrot.slane %v793, 5
        %v796 = vsel %vm342, %v791, %v795
        %v798 = vshrl.u32 %v697, 16
        %v800 = vrot.slane %v798, 4
        %v801 = vshll.u32 %v697, 16
        %v803 = vrot.slane %v801, 5
        %v804 = vor.u32 %v800, %v803
        %v805 = vrot.slane %v804, 4
        %v807 = vshll.u32 %v698, 16
        %v809 = vrot.slane %v807, 5
        %v810 = vsel %vm342, %v805, %v809
        %819 = vst [vmem:[#allocation2 + $0x20] sm:$0xf] %v712
        %820 = vst [vmem:[#allocation2 + $0x44] sm:$0xf] %v726
        %821 = vst [vmem:[#allocation2 + $0x68] sm:$0xf] %v740
        %822 = vst [vmem:[#allocation2 + $0x8c] sm:$0xf] %v754
        %823 = vst [vmem:[#allocation2 + $0xb0] sm:$0xf] %v768
        %824 = vst [vmem:[#allocation2 + $0xd4] sm:$0xf] %v782
        %825 = vst [vmem:[#allocation2 + $0xf8] sm:$0xf] %v796
        %826 = vst [vmem:[#allocation2 + $0x11c] sm:$0xf] %v810
        %v827 = vld [vmem:[#allocation2] sm:$0xff]
        %v828 = vld [vmem:[#allocation2 + $0x8] sm:$0xff]
        %v829 = vld [vmem:[#allocation2 + $0x10] sm:$0xff]
        %v830 = vld [vmem:[#allocation2 + $0x18] sm:$0xff]
        %v831 = vld [vmem:[#allocation2 + $0x20] sm:$0xf]
        %v832 = vld [vmem:[#allocation2 + $0x24] sm:$0xff]
        %v833 = vld [vmem:[#allocation2 + $0x2c] sm:$0xff]
        %v834 = vld [vmem:[#allocation2 + $0x34] sm:$0xff]
        %v835 = vld [vmem:[#allocation2 + $0x3c] sm:$0xff]
        %v836 = vld [vmem:[#allocation2 + $0x44] sm:$0xf]
        %v837 = vld [vmem:[#allocation2 + $0x48] sm:$0xff]
        %v838 = vld [vmem:[#allocation2 + $0x50] sm:$0xff]
        %v839 = vld [vmem:[#allocation2 + $0x58] sm:$0xff]
        %v840 = vld [vmem:[#allocation2 + $0x60] sm:$0xff]
        %v841 = vld [vmem:[#allocation2 + $0x68] sm:$0xf]
        %v842 = vld [vmem:[#allocation2 + $0x6c] sm:$0xff]
        %v843 = vld [vmem:[#allocation2 + $0x74] sm:$0xff]
        %v844 = vld [vmem:[#allocation2 + $0x7c] sm:$0xff]
        %v845 = vld [vmem:[#allocation2 + $0x84] sm:$0xff]
        %v846 = vld [vmem:[#allocation2 + $0x8c] sm:$0xf]
        %v847 = vld [vmem:[#allocation2 + $0x90] sm:$0xff]
        %v848 = vld [vmem:[#allocation2 + $0x98] sm:$0xff]
        %v849 = vld [vmem:[#allocation2 + $0xa0] sm:$0xff]
        %v850 = vld [vmem:[#allocation2 + $0xa8] sm:$0xff]
        %v851 = vld [vmem:[#allocation2 + $0xb0] sm:$0xf]
        %v852 = vld [vmem:[#allocation2 + $0xb4] sm:$0xff]
        %v853 = vld [vmem:[#allocation2 + $0xbc] sm:$0xff]
        %v854 = vld [vmem:[#allocation2 + $0xc4] sm:$0xff]
        %v855 = vld [vmem:[#allocation2 + $0xcc] sm:$0xff]
        %v856 = vld [vmem:[#allocation2 + $0xd4] sm:$0xf]
        %v857 = vld [vmem:[#allocation2 + $0xd8] sm:$0xff]
        %v858 = vld [vmem:[#allocation2 + $0xe0] sm:$0xff]
        %v859 = vld [vmem:[#allocation2 + $0xe8] sm:$0xff]
        %v860 = vld [vmem:[#allocation2 + $0xf0] sm:$0xff]
        %v861 = vld [vmem:[#allocation2 + $0xf8] sm:$0xf]
        %v862 = vld [vmem:[#allocation2 + $0xfc] sm:$0xff]
        %v863 = vld [vmem:[#allocation2 + $0x104] sm:$0xff]
        %v864 = vld [vmem:[#allocation2 + $0x10c] sm:$0xff]
        %v865 = vld [vmem:[#allocation2 + $0x114] sm:$0xff]
        %v866 = vld [vmem:[#allocation2 + $0x11c] sm:$0xf]
        %v867 = vld [vmem:[#allocation6] sm:$0xf]
        %v868 = vld [vmem:[#allocation6 + $0x4] sm:$0xf]
        %v869 = vld [vmem:[#allocation6 + $0x8] sm:$0xf]
        %v870 = vld [vmem:[#allocation6 + $0xc] sm:$0xf]
        %v871 = vld [vmem:[#allocation6 + $0x10] sm:$0xf]
        %v872 = vld [vmem:[#allocation6 + $0x14] sm:$0xf]
        %v873 = vld [vmem:[#allocation6 + $0x18] sm:$0xf]
        %v874 = vld [vmem:[#allocation6 + $0x1c] sm:$0xf]
        %v875 = vld [vmem:[#allocation6 + $0x20] sm:$0xf]
        %v876 = vld [vmem:[#allocation6 + $0x24] sm:$0xf]
        %v877 = vld [vmem:[#allocation6 + $0x28] sm:$0xf]
        %v878 = vld [vmem:[#allocation6 + $0x2c] sm:$0xf]
        %v879 = vld [vmem:[#allocation6 + $0x30] sm:$0xf]
        %v880 = vld [vmem:[#allocation6 + $0x34] sm:$0xf]
        %v881 = vld [vmem:[#allocation6 + $0x38] sm:$0xf]
        %v882 = vld [vmem:[#allocation6 + $0x3c] sm:$0xf]
        %v883 = vld [vmem:[#allocation6 + $0x40] sm:$0xf]
        %v884 = vld [vmem:[#allocation6 + $0x44] sm:$0xf]
        %v885 = vld [vmem:[#allocation6 + $0x48] sm:$0xf]
        %v886 = vld [vmem:[#allocation6 + $0x4c] sm:$0xf]
        %v887 = vld [vmem:[#allocation6 + $0x50] sm:$0xf]
        %v888 = vld [vmem:[#allocation6 + $0x54] sm:$0xf]
        %v889 = vld [vmem:[#allocation6 + $0x58] sm:$0xf]
        %v890 = vld [vmem:[#allocation6 + $0x5c] sm:$0xf]
        %v891 = vld [vmem:[#allocation6 + $0x60] sm:$0xf]
        %v892 = vld [vmem:[#allocation6 + $0x64] sm:$0xf]
        %v893 = vld [vmem:[#allocation6 + $0x68] sm:$0xf]
        %v894 = vld [vmem:[#allocation6 + $0x6c] sm:$0xf]
        %v895 = vld [vmem:[#allocation6 + $0x70] sm:$0xf]
        %v896 = vld [vmem:[#allocation6 + $0x74] sm:$0xf]
        %v897 = vld [vmem:[#allocation6 + $0x78] sm:$0xf]
        %v898 = vld [vmem:[#allocation6 + $0x7c] sm:$0xf]
        %v899 = vld [vmem:[#allocation6 + $0x80] sm:$0xf]
        %v900 = vld [vmem:[#allocation6 + $0x84] sm:$0xf]
        %v901 = vld [vmem:[#allocation6 + $0x88] sm:$0xf]
        %v902 = vld [vmem:[#allocation6 + $0x8c] sm:$0xf]
        %v903 = vld [vmem:[#allocation6 + $0x90] sm:$0xf]
        %v904 = vld [vmem:[#allocation6 + $0x94] sm:$0xf]
        %v905 = vld [vmem:[#allocation6 + $0x98] sm:$0xf]
        %v906 = vld [vmem:[#allocation6 + $0x9c] sm:$0xf]
        %v907 = vld [vmem:[#allocation6 + $0xa0] sm:$0xf]
        %v908 = vld [vmem:[#allocation6 + $0xa4] sm:$0xf]
        %v909 = vld [vmem:[#allocation6 + $0xa8] sm:$0xf]
        %v910 = vld [vmem:[#allocation6 + $0xac] sm:$0xf]
        %v911 = vld [vmem:[#allocation6 + $0xb0] sm:$0xf]
        %v912 = vld [vmem:[#allocation6 + $0xb4] sm:$0xf]
        %v913 = vld [vmem:[#allocation6 + $0xb8] sm:$0xf]
        %v914 = vld [vmem:[#allocation6 + $0xbc] sm:$0xf]
        %v915 = vld [vmem:[#allocation6 + $0xc0] sm:$0xf]
        %v916 = vld [vmem:[#allocation6 + $0xc4] sm:$0xf]
        %v917 = vld [vmem:[#allocation6 + $0xc8] sm:$0xf]
        %v918 = vld [vmem:[#allocation6 + $0xcc] sm:$0xf]
        %v919 = vld [vmem:[#allocation6 + $0xd0] sm:$0xf]
        %v920 = vld [vmem:[#allocation6 + $0xd4] sm:$0xf]
        %v921 = vld [vmem:[#allocation6 + $0xd8] sm:$0xf]
        %v922 = vld [vmem:[#allocation6 + $0xdc] sm:$0xf]
        %v923 = vld [vmem:[#allocation6 + $0xe0] sm:$0xf]
        %v924 = vld [vmem:[#allocation6 + $0xe4] sm:$0xf]
        %v925 = vld [vmem:[#allocation6 + $0xe8] sm:$0xf]
        %v926 = vld [vmem:[#allocation6 + $0xec] sm:$0xf]
        %v927 = vld [vmem:[#allocation6 + $0xf0] sm:$0xf]
        %v928 = vld [vmem:[#allocation6 + $0xf4] sm:$0xf]
        %v929 = vld [vmem:[#allocation6 + $0xf8] sm:$0xf]
        %v930 = vld [vmem:[#allocation6 + $0xfc] sm:$0xf]
        %v931 = vld [vmem:[#allocation6 + $0x100] sm:$0xf]
        %v932 = vld [vmem:[#allocation6 + $0x104] sm:$0xf]
        %v933 = vld [vmem:[#allocation6 + $0x108] sm:$0xf]
        %v934 = vld [vmem:[#allocation6 + $0x10c] sm:$0xf]
        %v935 = vld [vmem:[#allocation6 + $0x110] sm:$0xf]
        %v936 = vld [vmem:[#allocation6 + $0x114] sm:$0xf]
        %v937 = vld [vmem:[#allocation6 + $0x118] sm:$0xf]
        %v938 = vld [vmem:[#allocation6 + $0x11c] sm:$0xf]
        %v939 = vld [vmem:[#allocation6 + $0x120] sm:$0xf]
        %v940 = vld [vmem:[#allocation6 + $0x124] sm:$0xf]
        %v941 = vld [vmem:[#allocation6 + $0x128] sm:$0xf]
        %v942 = vld [vmem:[#allocation6 + $0x12c] sm:$0xf]
        %v943 = vld [vmem:[#allocation6 + $0x130] sm:$0xf]
        %v944 = vld [vmem:[#allocation6 + $0x134] sm:$0xf]
        %v945 = vld [vmem:[#allocation6 + $0x138] sm:$0xf]
        %v946 = vld [vmem:[#allocation6 + $0x13c] sm:$0xf]
        %v947 = vld [vmem:[#allocation6 + $0x140] sm:$0xf]
        %v948 = vld [vmem:[#allocation6 + $0x144] sm:$0xf]
        %v949 = vld [vmem:[#allocation6 + $0x148] sm:$0xf]
        %v950 = vld [vmem:[#allocation6 + $0x14c] sm:$0xf]
        %v951 = vld [vmem:[#allocation6 + $0x150] sm:$0xf]
        %v952 = vld [vmem:[#allocation6 + $0x154] sm:$0xf]
        %v953 = vld [vmem:[#allocation6 + $0x158] sm:$0xf]
        %v954 = vld [vmem:[#allocation6 + $0x15c] sm:$0xf]
        %v955 = vld [vmem:[#allocation6 + $0x160] sm:$0xf]
        %v956 = vld [vmem:[#allocation6 + $0x164] sm:$0xf]
        %v957 = vld [vmem:[#allocation6 + $0x168] sm:$0xf]
        %v958 = vld [vmem:[#allocation6 + $0x16c] sm:$0xf]
        %v959 = vld [vmem:[#allocation6 + $0x170] sm:$0xf]
        %v960 = vld [vmem:[#allocation6 + $0x174] sm:$0xf]
        %v961 = vld [vmem:[#allocation6 + $0x178] sm:$0xf]
        %v962 = vld [vmem:[#allocation6 + $0x17c] sm:$0xf]
        %v963 = vld [vmem:[#allocation6 + $0x180] sm:$0xf]
        %v964 = vld [vmem:[#allocation6 + $0x184] sm:$0xf]
        %v965 = vld [vmem:[#allocation6 + $0x188] sm:$0xf]
        %v966 = vld [vmem:[#allocation6 + $0x18c] sm:$0xf]
        %v967 = vld [vmem:[#allocation6 + $0x190] sm:$0xf]
        %v968 = vld [vmem:[#allocation6 + $0x194] sm:$0xf]
        %v969 = vld [vmem:[#allocation6 + $0x198] sm:$0xf]
        %v970 = vld [vmem:[#allocation6 + $0x19c] sm:$0xf]
        %v971 = vld [vmem:[#allocation6 + $0x1a0] sm:$0xf]
        %v972 = vld [vmem:[#allocation6 + $0x1a4] sm:$0xf]
        %v973 = vld [vmem:[#allocation6 + $0x1a8] sm:$0xf]
        %v974 = vld [vmem:[#allocation6 + $0x1ac] sm:$0xf]
        %v975 = vld [vmem:[#allocation6 + $0x1b0] sm:$0xf]
        %v976 = vld [vmem:[#allocation6 + $0x1b4] sm:$0xf]
        %v977 = vld [vmem:[#allocation6 + $0x1b8] sm:$0xf]
        %v978 = vld [vmem:[#allocation6 + $0x1bc] sm:$0xf]
        %v979 = vld [vmem:[#allocation6 + $0x1c0] sm:$0xf]
        %v980 = vld [vmem:[#allocation6 + $0x1c4] sm:$0xf]
        %v981 = vld [vmem:[#allocation6 + $0x1c8] sm:$0xf]
        %v982 = vld [vmem:[#allocation6 + $0x1cc] sm:$0xf]
        %v983 = vld [vmem:[#allocation6 + $0x1d0] sm:$0xf]
        %v984 = vld [vmem:[#allocation6 + $0x1d4] sm:$0xf]
        %v985 = vld [vmem:[#allocation6 + $0x1d8] sm:$0xf]
        %v986 = vld [vmem:[#allocation6 + $0x1dc] sm:$0xf]
        %v987 = vld [vmem:[#allocation6 + $0x1e0] sm:$0xf]
        %v988 = vld [vmem:[#allocation6 + $0x1e4] sm:$0xf]
        %v989 = vld [vmem:[#allocation6 + $0x1e8] sm:$0xf]
        %v990 = vld [vmem:[#allocation6 + $0x1ec] sm:$0xf]
        %v991 = vld [vmem:[#allocation6 + $0x1f0] sm:$0xf]
        %v992 = vld [vmem:[#allocation6 + $0x1f4] sm:$0xf]
        %v993 = vld [vmem:[#allocation6 + $0x1f8] sm:$0xf]
        %v994 = vld [vmem:[#allocation6 + $0x1fc] sm:$0xf]
        %v995 = vld [vmem:[#allocation6 + $0x200] sm:$0xf]
        %v996 = vld [vmem:[#allocation6 + $0x204] sm:$0xf]
        %v997 = vld [vmem:[#allocation6 + $0x208] sm:$0xf]
        %v998 = vld [vmem:[#allocation6 + $0x20c] sm:$0xf]
        %v999 = vld [vmem:[#allocation6 + $0x210] sm:$0xf]
        %v1000 = vld [vmem:[#allocation6 + $0x214] sm:$0xf]
        %v1001 = vld [vmem:[#allocation6 + $0x218] sm:$0xf]
        %v1002 = vld [vmem:[#allocation6 + $0x21c] sm:$0xf]
        %v1003 = vld [vmem:[#allocation6 + $0x220] sm:$0xf]
        %v1004 = vld [vmem:[#allocation6 + $0x224] sm:$0xf]
        %v1005 = vld [vmem:[#allocation6 + $0x228] sm:$0xf]
        %v1006 = vld [vmem:[#allocation6 + $0x22c] sm:$0xf]
        %v1007 = vld [vmem:[#allocation6 + $0x230] sm:$0xf]
        %v1008 = vld [vmem:[#allocation6 + $0x234] sm:$0xf]
        %v1009 = vld [vmem:[#allocation6 + $0x238] sm:$0xf]
        %v1010 = vld [vmem:[#allocation6 + $0x23c] sm:$0xf]
        %v1051 = vunpack.c.l.b16 %v827
        %v1052 = vunpack.c.h.b16 %v827
        %v1053 = vunpack.c.l.b16 %v828
        %v1054 = vunpack.c.h.b16 %v828
        %v1055 = vunpack.c.l.b16 %v829
        %v1056 = vunpack.c.h.b16 %v829
        %v1057 = vunpack.c.l.b16 %v830
        %v1058 = vunpack.c.h.b16 %v830
        %v1059 = vunpack.c.l.b16 %v831
        %v1060 = vunpack.c.l.b16 %v832
        %v1061 = vunpack.c.h.b16 %v832
        %v1062 = vunpack.c.l.b16 %v833
        %v1063 = vunpack.c.h.b16 %v833
        %v1064 = vunpack.c.l.b16 %v834
        %v1065 = vunpack.c.h.b16 %v834
        %v1066 = vunpack.c.l.b16 %v835
        %v1067 = vunpack.c.h.b16 %v835
        %v1068 = vunpack.c.l.b16 %v836
        %v1069 = vunpack.c.l.b16 %v837
        %v1070 = vunpack.c.h.b16 %v837
        %v1071 = vunpack.c.l.b16 %v838
        %v1072 = vunpack.c.h.b16 %v838
        %v1073 = vunpack.c.l.b16 %v839
        %v1074 = vunpack.c.h.b16 %v839
        %v1075 = vunpack.c.l.b16 %v840
        %v1076 = vunpack.c.h.b16 %v840
        %v1077 = vunpack.c.l.b16 %v841
        %v1078 = vunpack.c.l.b16 %v842
        %v1079 = vunpack.c.h.b16 %v842
        %v1080 = vunpack.c.l.b16 %v843
        %v1081 = vunpack.c.h.b16 %v843
        %v1082 = vunpack.c.l.b16 %v844
        %v1083 = vunpack.c.h.b16 %v844
        %v1084 = vunpack.c.l.b16 %v845
        %v1085 = vunpack.c.h.b16 %v845
        %v1086 = vunpack.c.l.b16 %v846
        %v1087 = vunpack.c.l.b16 %v847
        %v1088 = vunpack.c.h.b16 %v847
        %v1089 = vunpack.c.l.b16 %v848
        %v1090 = vunpack.c.h.b16 %v848
        %v1091 = vunpack.c.l.b16 %v849
        %v1092 = vunpack.c.h.b16 %v849
        %v1093 = vunpack.c.l.b16 %v850
        %v1094 = vunpack.c.h.b16 %v850
        %v1095 = vunpack.c.l.b16 %v851
        %v1096 = vunpack.c.l.b16 %v852
        %v1097 = vunpack.c.h.b16 %v852
        %v1098 = vunpack.c.l.b16 %v853
        %v1099 = vunpack.c.h.b16 %v853
        %v1100 = vunpack.c.l.b16 %v854
        %v1101 = vunpack.c.h.b16 %v854
        %v1102 = vunpack.c.l.b16 %v855
        %v1103 = vunpack.c.h.b16 %v855
        %v1104 = vunpack.c.l.b16 %v856
        %v1105 = vunpack.c.l.b16 %v857
        %v1106 = vunpack.c.h.b16 %v857
        %v1107 = vunpack.c.l.b16 %v858
        %v1108 = vunpack.c.h.b16 %v858
        %v1109 = vunpack.c.l.b16 %v859
        %v1110 = vunpack.c.h.b16 %v859
        %v1111 = vunpack.c.l.b16 %v860
        %v1112 = vunpack.c.h.b16 %v860
        %v1113 = vunpack.c.l.b16 %v861
        %v1114 = vunpack.c.l.b16 %v862
        %v1115 = vunpack.c.h.b16 %v862
        %v1116 = vunpack.c.l.b16 %v863
        %v1117 = vunpack.c.h.b16 %v863
        %v1118 = vunpack.c.l.b16 %v864
        %v1119 = vunpack.c.h.b16 %v864
        %v1120 = vunpack.c.l.b16 %v865
        %v1121 = vunpack.c.h.b16 %v865
        %v1122 = vunpack.c.l.b16 %v866
        %v1123 = vpack.c.b16 %v1060, %v1051
        %v1124 = vpack.c.b16 %v1061, %v1052
        %v1125 = vpack.c.b16 %v1062, %v1053
        %v1126 = vpack.c.b16 %v1063, %v1054
        %v1127 = vpack.c.b16 %v1064, %v1055
        %v1128 = vpack.c.b16 %v1065, %v1056
        %v1129 = vpack.c.b16 %v1066, %v1057
        %v1130 = vpack.c.b16 %v1067, %v1058
        %v1131 = vpack.c.b16 %v1068, %v1059
        %v1132 = vpack.c.b16 %v1078, %v1069
        %v1133 = vpack.c.b16 %v1079, %v1070
        %v1134 = vpack.c.b16 %v1080, %v1071
        %v1135 = vpack.c.b16 %v1081, %v1072
        %v1136 = vpack.c.b16 %v1082, %v1073
        %v1137 = vpack.c.b16 %v1083, %v1074
        %v1138 = vpack.c.b16 %v1084, %v1075
        %v1139 = vpack.c.b16 %v1085, %v1076
        %v1140 = vpack.c.b16 %v1086, %v1077
        %v1141 = vpack.c.b16 %v1096, %v1087
        %v1142 = vpack.c.b16 %v1097, %v1088
        %v1143 = vpack.c.b16 %v1098, %v1089
        %v1144 = vpack.c.b16 %v1099, %v1090
        %v1145 = vpack.c.b16 %v1100, %v1091
        %v1146 = vpack.c.b16 %v1101, %v1092
        %v1147 = vpack.c.b16 %v1102, %v1093
        %v1148 = vpack.c.b16 %v1103, %v1094
        %v1149 = vpack.c.b16 %v1104, %v1095
        %v1150 = vpack.c.b16 %v1114, %v1105
        %v1151 = vpack.c.b16 %v1115, %v1106
        %v1152 = vpack.c.b16 %v1116, %v1107
        %v1153 = vpack.c.b16 %v1117, %v1108
        %v1154 = vpack.c.b16 %v1118, %v1109
        %v1155 = vpack.c.b16 %v1119, %v1110
        %v1156 = vpack.c.b16 %v1120, %v1111
        %v1157 = vpack.c.b16 %v1121, %v1112
        %v1158 = vpack.c.b16 %v1122, %v1113
        %v1339 = vunpack.c.l.b16 %v867
        %v1340 = vunpack.c.l.b16 %v868
        %v1341 = vunpack.c.l.b16 %v869
        %v1342 = vunpack.c.l.b16 %v870
        %v1343 = vunpack.c.l.b16 %v871
        %v1344 = vunpack.c.l.b16 %v872
        %v1345 = vunpack.c.l.b16 %v873
        %v1346 = vunpack.c.l.b16 %v874
        %v1347 = vunpack.c.l.b16 %v875
        %v1348 = vunpack.c.l.b16 %v876
        %v1349 = vunpack.c.l.b16 %v877
        %v1350 = vunpack.c.l.b16 %v878
        %v1351 = vunpack.c.l.b16 %v879
        %v1352 = vunpack.c.l.b16 %v880
        %v1353 = vunpack.c.l.b16 %v881
        %v1354 = vunpack.c.l.b16 %v882
        %v1355 = vunpack.c.l.b16 %v883
        %v1356 = vunpack.c.l.b16 %v884
        %v1357 = vunpack.c.l.b16 %v885
        %v1358 = vunpack.c.l.b16 %v886
        %v1359 = vunpack.c.l.b16 %v887
        %v1360 = vunpack.c.l.b16 %v888
        %v1361 = vunpack.c.l.b16 %v889
        %v1362 = vunpack.c.l.b16 %v890
        %v1363 = vunpack.c.l.b16 %v891
        %v1364 = vunpack.c.l.b16 %v892
        %v1365 = vunpack.c.l.b16 %v893
        %v1366 = vunpack.c.l.b16 %v894
        %v1367 = vunpack.c.l.b16 %v895
        %v1368 = vunpack.c.l.b16 %v896
        %v1369 = vunpack.c.l.b16 %v897
        %v1370 = vunpack.c.l.b16 %v898
        %v1371 = vunpack.c.l.b16 %v899
        %v1372 = vunpack.c.l.b16 %v900
        %v1373 = vunpack.c.l.b16 %v901
        %v1374 = vunpack.c.l.b16 %v902
        %v1375 = vunpack.c.l.b16 %v903
        %v1376 = vunpack.c.l.b16 %v904
        %v1377 = vunpack.c.l.b16 %v905
        %v1378 = vunpack.c.l.b16 %v906
        %v1379 = vunpack.c.l.b16 %v907
        %v1380 = vunpack.c.l.b16 %v908
        %v1381 = vunpack.c.l.b16 %v909
        %v1382 = vunpack.c.l.b16 %v910
        %v1383 = vunpack.c.l.b16 %v911
        %v1384 = vunpack.c.l.b16 %v912
        %v1385 = vunpack.c.l.b16 %v913
        %v1386 = vunpack.c.l.b16 %v914
        %v1387 = vunpack.c.l.b16 %v915
        %v1388 = vunpack.c.l.b16 %v916
        %v1389 = vunpack.c.l.b16 %v917
        %v1390 = vunpack.c.l.b16 %v918
        %v1391 = vunpack.c.l.b16 %v919
        %v1392 = vunpack.c.l.b16 %v920
        %v1393 = vunpack.c.l.b16 %v921
        %v1394 = vunpack.c.l.b16 %v922
        %v1395 = vunpack.c.l.b16 %v923
        %v1396 = vunpack.c.l.b16 %v924
        %v1397 = vunpack.c.l.b16 %v925
        %v1398 = vunpack.c.l.b16 %v926
        %v1399 = vunpack.c.l.b16 %v927
        %v1400 = vunpack.c.l.b16 %v928
        %v1401 = vunpack.c.l.b16 %v929
        %v1402 = vunpack.c.l.b16 %v930
        %v1403 = vunpack.c.l.b16 %v931
        %v1404 = vunpack.c.l.b16 %v932
        %v1405 = vunpack.c.l.b16 %v933
        %v1406 = vunpack.c.l.b16 %v934
        %v1407 = vunpack.c.l.b16 %v935
        %v1408 = vunpack.c.l.b16 %v936
        %v1409 = vunpack.c.l.b16 %v937
        %v1410 = vunpack.c.l.b16 %v938
        %v1411 = vunpack.c.l.b16 %v939
        %v1412 = vunpack.c.l.b16 %v940
        %v1413 = vunpack.c.l.b16 %v941
        %v1414 = vunpack.c.l.b16 %v942
        %v1415 = vunpack.c.l.b16 %v943
        %v1416 = vunpack.c.l.b16 %v944
        %v1417 = vunpack.c.l.b16 %v945
        %v1418 = vunpack.c.l.b16 %v946
        %v1419 = vunpack.c.l.b16 %v947
        %v1420 = vunpack.c.l.b16 %v948
        %v1421 = vunpack.c.l.b16 %v949
        %v1422 = vunpack.c.l.b16 %v950
        %v1423 = vunpack.c.l.b16 %v951
        %v1424 = vunpack.c.l.b16 %v952
        %v1425 = vunpack.c.l.b16 %v953
        %v1426 = vunpack.c.l.b16 %v954
        %v1427 = vunpack.c.l.b16 %v955
        %v1428 = vunpack.c.l.b16 %v956
        %v1429 = vunpack.c.l.b16 %v957
        %v1430 = vunpack.c.l.b16 %v958
        %v1431 = vunpack.c.l.b16 %v959
        %v1432 = vunpack.c.l.b16 %v960
        %v1433 = vunpack.c.l.b16 %v961
        %v1434 = vunpack.c.l.b16 %v962
        %v1435 = vunpack.c.l.b16 %v963
        %v1436 = vunpack.c.l.b16 %v964
        %v1437 = vunpack.c.l.b16 %v965
        %v1438 = vunpack.c.l.b16 %v966
        %v1439 = vunpack.c.l.b16 %v967
        %v1440 = vunpack.c.l.b16 %v968
        %v1441 = vunpack.c.l.b16 %v969
        %v1442 = vunpack.c.l.b16 %v970
        %v1443 = vunpack.c.l.b16 %v971
        %v1444 = vunpack.c.l.b16 %v972
        %v1445 = vunpack.c.l.b16 %v973
        %v1446 = vunpack.c.l.b16 %v974
        %v1447 = vunpack.c.l.b16 %v975
        %v1448 = vunpack.c.l.b16 %v976
        %v1449 = vunpack.c.l.b16 %v977
        %v1450 = vunpack.c.l.b16 %v978
        %v1451 = vunpack.c.l.b16 %v979
        %v1452 = vunpack.c.l.b16 %v980
        %v1453 = vunpack.c.l.b16 %v981
        %v1454 = vunpack.c.l.b16 %v982
        %v1455 = vunpack.c.l.b16 %v983
        %v1456 = vunpack.c.l.b16 %v984
        %v1457 = vunpack.c.l.b16 %v985
        %v1458 = vunpack.c.l.b16 %v986
        %v1459 = vunpack.c.l.b16 %v987
        %v1460 = vunpack.c.l.b16 %v988
        %v1461 = vunpack.c.l.b16 %v989
        %v1462 = vunpack.c.l.b16 %v990
        %v1463 = vunpack.c.l.b16 %v991
        %v1464 = vunpack.c.l.b16 %v992
        %v1465 = vunpack.c.l.b16 %v993
        %v1466 = vunpack.c.l.b16 %v994
        %v1467 = vunpack.c.l.b16 %v995
        %v1468 = vunpack.c.l.b16 %v996
        %v1469 = vunpack.c.l.b16 %v997
        %v1470 = vunpack.c.l.b16 %v998
        %v1471 = vunpack.c.l.b16 %v999
        %v1472 = vunpack.c.l.b16 %v1000
        %v1473 = vunpack.c.l.b16 %v1001
        %v1474 = vunpack.c.l.b16 %v1002
        %v1475 = vunpack.c.l.b16 %v1003
        %v1476 = vunpack.c.l.b16 %v1004
        %v1477 = vunpack.c.l.b16 %v1005
        %v1478 = vunpack.c.l.b16 %v1006
        %v1479 = vunpack.c.l.b16 %v1007
        %v1480 = vunpack.c.l.b16 %v1008
        %v1481 = vunpack.c.l.b16 %v1009
        %v1482 = vunpack.c.l.b16 %v1010
        %v1483 = vpack.c.b16 %v1340, %v1339
        %v1484 = vpack.c.b16 %v1342, %v1341
        %v1485 = vpack.c.b16 %v1344, %v1343
        %v1486 = vpack.c.b16 %v1346, %v1345
        %v1487 = vpack.c.b16 %v1348, %v1347
        %v1488 = vpack.c.b16 %v1350, %v1349
        %v1489 = vpack.c.b16 %v1352, %v1351
        %v1490 = vpack.c.b16 %v1354, %v1353
        %v1491 = vpack.c.b16 %v1356, %v1355
        %v1492 = vpack.c.b16 %v1358, %v1357
        %v1493 = vpack.c.b16 %v1360, %v1359
        %v1494 = vpack.c.b16 %v1362, %v1361
        %v1495 = vpack.c.b16 %v1364, %v1363
        %v1496 = vpack.c.b16 %v1366, %v1365
        %v1497 = vpack.c.b16 %v1368, %v1367
        %v1498 = vpack.c.b16 %v1370, %v1369
        %v1499 = vpack.c.b16 %v1372, %v1371
        %v1500 = vpack.c.b16 %v1374, %v1373
        %v1501 = vpack.c.b16 %v1376, %v1375
        %v1502 = vpack.c.b16 %v1378, %v1377
        %v1503 = vpack.c.b16 %v1380, %v1379
        %v1504 = vpack.c.b16 %v1382, %v1381
        %v1505 = vpack.c.b16 %v1384, %v1383
        %v1506 = vpack.c.b16 %v1386, %v1385
        %v1507 = vpack.c.b16 %v1388, %v1387
        %v1508 = vpack.c.b16 %v1390, %v1389
        %v1509 = vpack.c.b16 %v1392, %v1391
        %v1510 = vpack.c.b16 %v1394, %v1393
        %v1511 = vpack.c.b16 %v1396, %v1395
        %v1512 = vpack.c.b16 %v1398, %v1397
        %v1513 = vpack.c.b16 %v1400, %v1399
        %v1514 = vpack.c.b16 %v1402, %v1401
        %v1515 = vpack.c.b16 %v1404, %v1403
        %v1516 = vpack.c.b16 %v1406, %v1405
        %v1517 = vpack.c.b16 %v1408, %v1407
        %v1518 = vpack.c.b16 %v1410, %v1409
        %v1519 = vpack.c.b16 %v1412, %v1411
        %v1520 = vpack.c.b16 %v1414, %v1413
        %v1521 = vpack.c.b16 %v1416, %v1415
        %v1522 = vpack.c.b16 %v1418, %v1417
        %v1523 = vpack.c.b16 %v1420, %v1419
        %v1524 = vpack.c.b16 %v1422, %v1421
        %v1525 = vpack.c.b16 %v1424, %v1423
        %v1526 = vpack.c.b16 %v1426, %v1425
        %v1527 = vpack.c.b16 %v1428, %v1427
        %v1528 = vpack.c.b16 %v1430, %v1429
        %v1529 = vpack.c.b16 %v1432, %v1431
        %v1530 = vpack.c.b16 %v1434, %v1433
        %v1531 = vpack.c.b16 %v1436, %v1435
        %v1532 = vpack.c.b16 %v1438, %v1437
        %v1533 = vpack.c.b16 %v1440, %v1439
        %v1534 = vpack.c.b16 %v1442, %v1441
        %v1535 = vpack.c.b16 %v1444, %v1443
        %v1536 = vpack.c.b16 %v1446, %v1445
        %v1537 = vpack.c.b16 %v1448, %v1447
        %v1538 = vpack.c.b16 %v1450, %v1449
        %v1539 = vpack.c.b16 %v1452, %v1451
        %v1540 = vpack.c.b16 %v1454, %v1453
        %v1541 = vpack.c.b16 %v1456, %v1455
        %v1542 = vpack.c.b16 %v1458, %v1457
        %v1543 = vpack.c.b16 %v1460, %v1459
        %v1544 = vpack.c.b16 %v1462, %v1461
        %v1545 = vpack.c.b16 %v1464, %v1463
        %v1546 = vpack.c.b16 %v1466, %v1465
        %v1547 = vpack.c.b16 %v1468, %v1467
        %v1548 = vpack.c.b16 %v1470, %v1469
        %v1549 = vpack.c.b16 %v1472, %v1471
        %v1550 = vpack.c.b16 %v1474, %v1473
        %v1551 = vpack.c.b16 %v1476, %v1475
        %v1552 = vpack.c.b16 %v1478, %v1477
        %v1553 = vpack.c.b16 %v1480, %v1479
        %v1554 = vpack.c.b16 %v1482, %v1481
        %1627 = vmatprep.subr.bf16.mxu0 0
        %1628 = vmatpush1.bf16.msra.mxu0 %v1490
        %1629 = vmatprep.subr.bf16.mxu0 0
        %1630 = vmatpush1.bf16.msra.mxu0 %v1489
        %1631 = vmatprep.subr.bf16.mxu0 0
        %1632 = vmatpush1.bf16.msra.mxu0 %v1488
        %1633 = vmatprep.subr.bf16.mxu0 0
        %1634 = vmatpush1.bf16.msra.mxu0 %v1487
        %1635 = vmatprep.subr.bf16.mxu0 0
        %1636 = vmatpush1.bf16.msra.mxu0 %v1486
        %1637 = vmatprep.subr.bf16.mxu0 0
        %1638 = vmatpush1.bf16.msra.mxu0 %v1485
        %1639 = vmatprep.subr.bf16.mxu0 0
        %1640 = vmatpush1.bf16.msra.mxu0 %v1484
        %1641 = vmatprep.subr.bf16.mxu0 0
        %1642 = vmatpush1.bf16.msra.mxu0 %v1483
        %1643 = vmatprep.subr.bf16.mxu0 0
        %1644 = vmatpush2.bf16.msra.mxu0 %v1498
        %1645 = vmatprep.subr.bf16.mxu0 0
        %1646 = vmatpush2.bf16.msra.mxu0 %v1497
        %1647 = vmatprep.subr.bf16.mxu0 0
        %1648 = vmatpush2.bf16.msra.mxu0 %v1496
        %1649 = vmatprep.subr.bf16.mxu0 0
        %1650 = vmatpush2.bf16.msra.mxu0 %v1495
        %1651 = vmatprep.subr.bf16.mxu0 0
        %1652 = vmatpush2.bf16.msra.mxu0 %v1494
        %1653 = vmatprep.subr.bf16.mxu0 0
        %1654 = vmatpush2.bf16.msra.mxu0 %v1493
        %1655 = vmatprep.subr.bf16.mxu0 0
        %1656 = vmatpush2.bf16.msra.mxu0 %v1492
        %1657 = vmatprep.subr.bf16.mxu0 0
        %1658 = vmatpush2.bf16.msra.mxu0 %v1491
        %1659 = vmatprep.mubr.bf16.mxu0 %v1124
        %1660 = vmatmul.mubr.bf16.gmra.mxu0 %v1123
        %v1661 = vpop.f32.mrf.mxu0
        %v1662 = vadd.f32 0.0, %v1661
        %v1663 = vpop.f32.mrf.mxu0
        %v1664 = vpop.f32.mrf.mxu0
        %v1665 = vadd.f32 0.0, %v1664
        %v1666 = vpop.f32.mrf.mxu0
        %1667 = vmatprep.mubr.bf16.mxu0 %v1133
        %1668 = vmatmul.mubr.bf16.gmra.mxu0 %v1132
        %v1669 = vpop.f32.mrf.mxu0
        %v1670 = vadd.f32 0.0, %v1669
        %v1671 = vpop.f32.mrf.mxu0
        %v1672 = vpop.f32.mrf.mxu0
        %v1673 = vadd.f32 0.0, %v1672
        %v1674 = vpop.f32.mrf.mxu0
        %1675 = vmatprep.mubr.bf16.mxu0 %v1142
        %1676 = vmatmul.mubr.bf16.gmra.mxu0 %v1141
        %v1677 = vpop.f32.mrf.mxu0
        %v1678 = vadd.f32 0.0, %v1677
        %v1679 = vpop.f32.mrf.mxu0
        %v1680 = vpop.f32.mrf.mxu0
        %v1681 = vadd.f32 0.0, %v1680
        %v1682 = vpop.f32.mrf.mxu0
        %1683 = vmatprep.mubr.bf16.mxu0 %v1151
        %1684 = vmatmul.mubr.bf16.gmra.mxu0 %v1150
        %v1685 = vpop.f32.mrf.mxu0
        %v1686 = vadd.f32 0.0, %v1685
        %v1687 = vpop.f32.mrf.mxu0
        %v1688 = vpop.f32.mrf.mxu0
        %v1689 = vadd.f32 0.0, %v1688
        %v1690 = vpop.f32.mrf.mxu0
        %1691 = vdwg.mxu0
        %1692 = vmatprep.subr.bf16.mxu0 0
        %1693 = vmatpush1.bf16.msra.mxu0 %v1506
        %1694 = vmatprep.subr.bf16.mxu0 0
        %1695 = vmatpush1.bf16.msra.mxu0 %v1505
        %1696 = vmatprep.subr.bf16.mxu0 0
        %1697 = vmatpush1.bf16.msra.mxu0 %v1504
        %1698 = vmatprep.subr.bf16.mxu0 0
        %1699 = vmatpush1.bf16.msra.mxu0 %v1503
        %1700 = vmatprep.subr.bf16.mxu0 0
        %1701 = vmatpush1.bf16.msra.mxu0 %v1502
        %1702 = vmatprep.subr.bf16.mxu0 0
        %1703 = vmatpush1.bf16.msra.mxu0 %v1501
        %1704 = vmatprep.subr.bf16.mxu0 0
        %1705 = vmatpush1.bf16.msra.mxu0 %v1500
        %1706 = vmatprep.subr.bf16.mxu0 0
        %1707 = vmatpush1.bf16.msra.mxu0 %v1499
        %1708 = vmatprep.subr.bf16.mxu0 0
        %1709 = vmatpush2.bf16.msra.mxu0 %v1514
        %1710 = vmatprep.subr.bf16.mxu0 0
        %1711 = vmatpush2.bf16.msra.mxu0 %v1513
        %1712 = vmatprep.subr.bf16.mxu0 0
        %1713 = vmatpush2.bf16.msra.mxu0 %v1512
        %1714 = vmatprep.subr.bf16.mxu0 0
        %1715 = vmatpush2.bf16.msra.mxu0 %v1511
        %1716 = vmatprep.subr.bf16.mxu0 0
        %1717 = vmatpush2.bf16.msra.mxu0 %v1510
        %1718 = vmatprep.subr.bf16.mxu0 0
        %1719 = vmatpush2.bf16.msra.mxu0 %v1509
        %1720 = vmatprep.subr.bf16.mxu0 0
        %1721 = vmatpush2.bf16.msra.mxu0 %v1508
        %1722 = vmatprep.subr.bf16.mxu0 0
        %1723 = vmatpush2.bf16.msra.mxu0 %v1507
        %1724 = vmatprep.mubr.bf16.mxu0 %v1126
        %1725 = vmatmul.mubr.bf16.gmra.mxu0 %v1125
        %v1726 = vpop.f32.mrf.mxu0
        %v1727 = vadd.f32 %v1662, %v1726
        %v1728 = vpop.f32.mrf.mxu0
        %v1729 = vpop.f32.mrf.mxu0
        %v1730 = vadd.f32 %v1665, %v1729
        %v1731 = vpop.f32.mrf.mxu0
        %1732 = vmatprep.mubr.bf16.mxu0 %v1135
        %1733 = vmatmul.mubr.bf16.gmra.mxu0 %v1134
        %v1734 = vpop.f32.mrf.mxu0
        %v1735 = vadd.f32 %v1670, %v1734
        %v1736 = vpop.f32.mrf.mxu0
        %v1737 = vpop.f32.mrf.mxu0
        %v1738 = vadd.f32 %v1673, %v1737
        %v1739 = vpop.f32.mrf.mxu0
        %1740 = vmatprep.mubr.bf16.mxu0 %v1144
        %1741 = vmatmul.mubr.bf16.gmra.mxu0 %v1143
        %v1742 = vpop.f32.mrf.mxu0
        %v1743 = vadd.f32 %v1678, %v1742
        %v1744 = vpop.f32.mrf.mxu0
        %v1745 = vpop.f32.mrf.mxu0
        %v1746 = vadd.f32 %v1681, %v1745
        %v1747 = vpop.f32.mrf.mxu0
        %1748 = vmatprep.mubr.bf16.mxu0 %v1153
        %1749 = vmatmul.mubr.bf16.gmra.mxu0 %v1152
        %v1750 = vpop.f32.mrf.mxu0
        %v1751 = vadd.f32 %v1686, %v1750
        %v1752 = vpop.f32.mrf.mxu0
        %v1753 = vpop.f32.mrf.mxu0
        %v1754 = vadd.f32 %v1689, %v1753
        %v1755 = vpop.f32.mrf.mxu0
        %1756 = vdwg.mxu0
        %1757 = vmatprep.subr.bf16.mxu0 0
        %1758 = vmatpush1.bf16.msra.mxu0 %v1522
        %1759 = vmatprep.subr.bf16.mxu0 0
        %1760 = vmatpush1.bf16.msra.mxu0 %v1521
        %1761 = vmatprep.subr.bf16.mxu0 0
        %1762 = vmatpush1.bf16.msra.mxu0 %v1520
        %1763 = vmatprep.subr.bf16.mxu0 0
        %1764 = vmatpush1.bf16.msra.mxu0 %v1519
        %1765 = vmatprep.subr.bf16.mxu0 0
        %1766 = vmatpush1.bf16.msra.mxu0 %v1518
        %1767 = vmatprep.subr.bf16.mxu0 0
        %1768 = vmatpush1.bf16.msra.mxu0 %v1517
        %1769 = vmatprep.subr.bf16.mxu0 0
        %1770 = vmatpush1.bf16.msra.mxu0 %v1516
        %1771 = vmatprep.subr.bf16.mxu0 0
        %1772 = vmatpush1.bf16.msra.mxu0 %v1515
        %1773 = vmatprep.subr.bf16.mxu0 0
        %1774 = vmatpush2.bf16.msra.mxu0 %v1530
        %1775 = vmatprep.subr.bf16.mxu0 0
        %1776 = vmatpush2.bf16.msra.mxu0 %v1529
        %1777 = vmatprep.subr.bf16.mxu0 0
        %1778 = vmatpush2.bf16.msra.mxu0 %v1528
        %1779 = vmatprep.subr.bf16.mxu0 0
        %1780 = vmatpush2.bf16.msra.mxu0 %v1527
        %1781 = vmatprep.subr.bf16.mxu0 0
        %1782 = vmatpush2.bf16.msra.mxu0 %v1526
        %1783 = vmatprep.subr.bf16.mxu0 0
        %1784 = vmatpush2.bf16.msra.mxu0 %v1525
        %1785 = vmatprep.subr.bf16.mxu0 0
        %1786 = vmatpush2.bf16.msra.mxu0 %v1524
        %1787 = vmatprep.subr.bf16.mxu0 0
        %1788 = vmatpush2.bf16.msra.mxu0 %v1523
        %1789 = vmatprep.mubr.bf16.mxu0 %v1128
        %1790 = vmatmul.mubr.bf16.gmra.mxu0 %v1127
        %v1791 = vpop.f32.mrf.mxu0
        %v1792 = vadd.f32 %v1727, %v1791
        %v1793 = vpop.f32.mrf.mxu0
        %v1794 = vpop.f32.mrf.mxu0
        %v1795 = vadd.f32 %v1730, %v1794
        %v1796 = vpop.f32.mrf.mxu0
        %1797 = vmatprep.mubr.bf16.mxu0 %v1137
        %1798 = vmatmul.mubr.bf16.gmra.mxu0 %v1136
        %v1799 = vpop.f32.mrf.mxu0
        %v1800 = vadd.f32 %v1735, %v1799
        %v1801 = vpop.f32.mrf.mxu0
        %v1802 = vpop.f32.mrf.mxu0
        %v1803 = vadd.f32 %v1738, %v1802
        %v1804 = vpop.f32.mrf.mxu0
        %1805 = vmatprep.mubr.bf16.mxu0 %v1146
        %1806 = vmatmul.mubr.bf16.gmra.mxu0 %v1145
        %v1807 = vpop.f32.mrf.mxu0
        %v1808 = vadd.f32 %v1743, %v1807
        %v1809 = vpop.f32.mrf.mxu0
        %v1810 = vpop.f32.mrf.mxu0
        %v1811 = vadd.f32 %v1746, %v1810
        %v1812 = vpop.f32.mrf.mxu0
        %1813 = vmatprep.mubr.bf16.mxu0 %v1155
        %1814 = vmatmul.mubr.bf16.gmra.mxu0 %v1154
        %v1815 = vpop.f32.mrf.mxu0
        %v1816 = vadd.f32 %v1751, %v1815
        %v1817 = vpop.f32.mrf.mxu0
        %v1818 = vpop.f32.mrf.mxu0
        %v1819 = vadd.f32 %v1754, %v1818
        %v1820 = vpop.f32.mrf.mxu0
        %1821 = vdwg.mxu0
        %1822 = vmatprep.subr.bf16.mxu0 0
        %1823 = vmatpush1.bf16.msra.mxu0 %v1538
        %1824 = vmatprep.subr.bf16.mxu0 0
        %1825 = vmatpush1.bf16.msra.mxu0 %v1537
        %1826 = vmatprep.subr.bf16.mxu0 0
        %1827 = vmatpush1.bf16.msra.mxu0 %v1536
        %1828 = vmatprep.subr.bf16.mxu0 0
        %1829 = vmatpush1.bf16.msra.mxu0 %v1535
        %1830 = vmatprep.subr.bf16.mxu0 0
        %1831 = vmatpush1.bf16.msra.mxu0 %v1534
        %1832 = vmatprep.subr.bf16.mxu0 0
        %1833 = vmatpush1.bf16.msra.mxu0 %v1533
        %1834 = vmatprep.subr.bf16.mxu0 0
        %1835 = vmatpush1.bf16.msra.mxu0 %v1532
        %1836 = vmatprep.subr.bf16.mxu0 0
        %1837 = vmatpush1.bf16.msra.mxu0 %v1531
        %1838 = vmatprep.subr.bf16.mxu0 0
        %1839 = vmatpush2.bf16.msra.mxu0 %v1546
        %1840 = vmatprep.subr.bf16.mxu0 0
        %1841 = vmatpush2.bf16.msra.mxu0 %v1545
        %1842 = vmatprep.subr.bf16.mxu0 0
        %1843 = vmatpush2.bf16.msra.mxu0 %v1544
        %1844 = vmatprep.subr.bf16.mxu0 0
        %1845 = vmatpush2.bf16.msra.mxu0 %v1543
        %1846 = vmatprep.subr.bf16.mxu0 0
        %1847 = vmatpush2.bf16.msra.mxu0 %v1542
        %1848 = vmatprep.subr.bf16.mxu0 0
        %1849 = vmatpush2.bf16.msra.mxu0 %v1541
        %1850 = vmatprep.subr.bf16.mxu0 0
        %1851 = vmatpush2.bf16.msra.mxu0 %v1540
        %1852 = vmatprep.subr.bf16.mxu0 0
        %1853 = vmatpush2.bf16.msra.mxu0 %v1539
        %1854 = vmatprep.mubr.bf16.mxu0 %v1130
        %1855 = vmatmul.mubr.bf16.gmra.mxu0 %v1129
        %v1856 = vpop.f32.mrf.mxu0
        %v1857 = vadd.f32 %v1792, %v1856
        %v1858 = vpop.f32.mrf.mxu0
        %v1859 = vpop.f32.mrf.mxu0
        %v1860 = vadd.f32 %v1795, %v1859
        %v1861 = vpop.f32.mrf.mxu0
        %1862 = vmatprep.mubr.bf16.mxu0 %v1139
        %1863 = vmatmul.mubr.bf16.gmra.mxu0 %v1138
        %v1864 = vpop.f32.mrf.mxu0
        %v1865 = vadd.f32 %v1800, %v1864
        %v1866 = vpop.f32.mrf.mxu0
        %v1867 = vpop.f32.mrf.mxu0
        %v1868 = vadd.f32 %v1803, %v1867
        %v1869 = vpop.f32.mrf.mxu0
        %1870 = vmatprep.mubr.bf16.mxu0 %v1148
        %1871 = vmatmul.mubr.bf16.gmra.mxu0 %v1147
        %v1872 = vpop.f32.mrf.mxu0
        %v1873 = vadd.f32 %v1808, %v1872
        %v1874 = vpop.f32.mrf.mxu0
        %v1875 = vpop.f32.mrf.mxu0
        %v1876 = vadd.f32 %v1811, %v1875
        %v1877 = vpop.f32.mrf.mxu0
        %1878 = vmatprep.mubr.bf16.mxu0 %v1157
        %1879 = vmatmul.mubr.bf16.gmra.mxu0 %v1156
        %v1880 = vpop.f32.mrf.mxu0
        %v1881 = vadd.f32 %v1816, %v1880
        %v1882 = vpop.f32.mrf.mxu0
        %v1883 = vpop.f32.mrf.mxu0
        %v1884 = vadd.f32 %v1819, %v1883
        %v1885 = vpop.f32.mrf.mxu0
        %1886 = vdwg.mxu0
        %1887 = vmatprep.subr.bf16.mxu0 0
        %1888 = vmatpush1.bf16.msra.mxu0 %v1554
        %1889 = vmatprep.subr.bf16.mxu0 0
        %1890 = vmatpush1.bf16.msra.mxu0 %v1553
        %1891 = vmatprep.subr.bf16.mxu0 0
        %1892 = vmatpush1.bf16.msra.mxu0 %v1552
        %1893 = vmatprep.subr.bf16.mxu0 0
        %1894 = vmatpush1.bf16.msra.mxu0 %v1551
        %1895 = vmatprep.subr.bf16.mxu0 0
        %1896 = vmatpush1.bf16.msra.mxu0 %v1550
        %1897 = vmatprep.subr.bf16.mxu0 0
        %1898 = vmatpush1.bf16.msra.mxu0 %v1549
        %1899 = vmatprep.subr.bf16.mxu0 0
        %1900 = vmatpush1.bf16.msra.mxu0 %v1548
        %1901 = vmatprep.subr.bf16.mxu0 0
        %1902 = vmatpush1.bf16.msra.mxu0 %v1547
        %1903 = vmatprep.subr.bf16.mxu0 0
        %1904 = vmatpush2.bf16.msra.mxu0 0
        %1905 = vmatprep.subr.bf16.mxu0 0
        %1906 = vmatpush2.bf16.msra.mxu0 0
        %1907 = vmatprep.subr.bf16.mxu0 0
        %1908 = vmatpush2.bf16.msra.mxu0 0
        %1909 = vmatprep.subr.bf16.mxu0 0
        %1910 = vmatpush2.bf16.msra.mxu0 0
        %1911 = vmatprep.subr.bf16.mxu0 0
        %1912 = vmatpush2.bf16.msra.mxu0 0
        %1913 = vmatprep.subr.bf16.mxu0 0
        %1914 = vmatpush2.bf16.msra.mxu0 0
        %1915 = vmatprep.subr.bf16.mxu0 0
        %1916 = vmatpush2.bf16.msra.mxu0 0
        %1917 = vmatprep.subr.bf16.mxu0 0
        %1918 = vmatpush2.bf16.msra.mxu0 0
        %1919 = vmatprep.mubr.bf16.mxu0 0
        %1920 = vmatmul.mubr.bf16.gmra.mxu0 %v1131
        %v1921 = vpop.f32.mrf.mxu0
        %v1922 = vadd.f32 %v1857, %v1921
        %v1923 = vpop.f32.mrf.mxu0
        %v1924 = vpop.f32.mrf.mxu0
        %v1925 = vadd.f32 %v1860, %v1924
        %v1926 = vpop.f32.mrf.mxu0
        %1927 = vmatprep.mubr.bf16.mxu0 0
        %1928 = vmatmul.mubr.bf16.gmra.mxu0 %v1140
        %v1929 = vpop.f32.mrf.mxu0
        %v1930 = vadd.f32 %v1865, %v1929
        %v1931 = vpop.f32.mrf.mxu0
        %v1932 = vpop.f32.mrf.mxu0
        %v1933 = vadd.f32 %v1868, %v1932
        %v1934 = vpop.f32.mrf.mxu0
        %1935 = vmatprep.mubr.bf16.mxu0 0
        %1936 = vmatmul.mubr.bf16.gmra.mxu0 %v1149
        %v1937 = vpop.f32.mrf.mxu0
        %v1938 = vadd.f32 %v1873, %v1937
        %v1939 = vpop.f32.mrf.mxu0
        %v1940 = vpop.f32.mrf.mxu0
        %v1941 = vadd.f32 %v1876, %v1940
        %v1942 = vpop.f32.mrf.mxu0
        %1943 = vmatprep.mubr.bf16.mxu0 0
        %1944 = vmatmul.mubr.bf16.gmra.mxu0 %v1158
        %v1945 = vpop.f32.mrf.mxu0
        %v1946 = vadd.f32 %v1881, %v1945
        %v1947 = vpop.f32.mrf.mxu0
        %v1948 = vpop.f32.mrf.mxu0
        %v1949 = vadd.f32 %v1884, %v1948
        %v1950 = vpop.f32.mrf.mxu0
        %1951 = vdwg.mxu0
        %v1952 = vpack.c.bf16 %v1922, %v1922
        %v1953 = vpack.c.bf16 %v1925, %v1925
        %v1954 = vpack.c.bf16 %v1930, %v1930
        %v1955 = vpack.c.bf16 %v1933, %v1933
        %v1956 = vpack.c.bf16 %v1938, %v1938
        %v1957 = vpack.c.bf16 %v1941, %v1941
        %v1958 = vpack.c.bf16 %v1946, %v1946
        %v1959 = vpack.c.bf16 %v1949, %v1949
        %1960 = vst [vmem:[%s275] sm:$0xf] %v1952
        %1961 = vst [vmem:[%s275 + $0x4] sm:$0xf] %v1953
        %1962 = vst [vmem:[%s275 + $0x8] sm:$0xf] %v1954
        %1963 = vst [vmem:[%s275 + $0xc] sm:$0xf] %v1955
        %1964 = vst [vmem:[%s275 + $0x10] sm:$0xf] %v1956
        %1965 = vst [vmem:[%s275 + $0x14] sm:$0xf] %v1957
        %1966 = vst [vmem:[%s275 + $0x18] sm:$0xf] %v1958
        %1967 = vst [vmem:[%s275 + $0x1c] sm:$0xf] %v1959
        %v1968 = vadd.f32 %v1922, %v1925
        %v1969 = vadd.f32 %v1968, %v1930
        %v1970 = vadd.f32 %v1969, %v1933
        %v1971 = vadd.f32 %v1970, %v1938
        %v1972 = vadd.f32 %v1971, %v1941
        %v1973 = vadd.f32 %v1972, %v1946
        %v1974 = vadd.f32 %v1973, %v1949
        %v1975 = vrot.slane %v1974, 4
        %v1976 = vadd.f32 %v1974, %v1975
        %v1977 = vrot.slane %v1976, 2
        %v1978 = vadd.f32 %v1976, %v1977
        %v1979 = vrot.slane %v1978, 1
        %v1980 = vadd.f32 %v1978, %v1979
        %v1981 = vmul.f32 %v1922, %v1922
        %v1982 = vmul.f32 %v1925, %v1925
        %v1983 = vmul.f32 %v1930, %v1930
        %v1984 = vmul.f32 %v1933, %v1933
        %v1985 = vmul.f32 %v1938, %v1938
        %v1986 = vmul.f32 %v1941, %v1941
        %v1987 = vmul.f32 %v1946, %v1946
        %v1988 = vmul.f32 %v1949, %v1949
        %v1989 = vadd.f32 %v1981, %v1982
        %v1990 = vadd.f32 %v1989, %v1983
        %v1991 = vadd.f32 %v1990, %v1984
        %v1992 = vadd.f32 %v1991, %v1985
        %v1993 = vadd.f32 %v1992, %v1986
        %v1994 = vadd.f32 %v1993, %v1987
        %v1995 = vadd.f32 %v1994, %v1988
        %v1996 = vrot.slane %v1995, 4
        %v1997 = vadd.f32 %v1995, %v1996
        %v1998 = vrot.slane %v1997, 2
        %v1999 = vadd.f32 %v1997, %v1998
        %v2000 = vrot.slane %v1999, 1
        %v2001 = vadd.f32 %v1999, %v2000
        %v2002 = vld [vmem:[#allocation2 + $0x10] sm:$0xf]
        %v2003 = vld [vmem:[#allocation2 + $0x34] sm:$0xf]
        %v2004 = vld [vmem:[#allocation2 + $0x58] sm:$0xf]
        %v2005 = vld [vmem:[#allocation2 + $0x7c] sm:$0xf]
        %v2006 = vld [vmem:[#allocation2 + $0xa0] sm:$0xf]
        %v2007 = vld [vmem:[#allocation2 + $0xc4] sm:$0xf]
        %v2008 = vld [vmem:[#allocation2 + $0xe8] sm:$0xf]
        %v2009 = vld [vmem:[#allocation2 + $0x10c] sm:$0xf]
        %v2010 = vld [vmem:[#allocation8] sm:$0xf]
        %v2011 = vld [vmem:[#allocation8 + $0x4] sm:$0xf]
        %v2012 = vld [vmem:[#allocation8 + $0x8] sm:$0xf]
        %v2013 = vld [vmem:[#allocation8 + $0xc] sm:$0xf]
        %v2014 = vld [vmem:[#allocation8 + $0x10] sm:$0xf]
        %v2015 = vld [vmem:[#allocation8 + $0x14] sm:$0xf]
        %v2016 = vld [vmem:[#allocation8 + $0x18] sm:$0xf]
        %v2017 = vld [vmem:[#allocation8 + $0x1c] sm:$0xf]
        %v2018 = vld [vmem:[#allocation8 + $0x20] sm:$0xf]
        %v2019 = vld [vmem:[#allocation8 + $0x24] sm:$0xf]
        %v2020 = vld [vmem:[#allocation8 + $0x28] sm:$0xf]
        %v2021 = vld [vmem:[#allocation8 + $0x2c] sm:$0xf]
        %v2022 = vld [vmem:[#allocation8 + $0x30] sm:$0xf]
        %v2023 = vld [vmem:[#allocation8 + $0x34] sm:$0xf]
        %v2024 = vld [vmem:[#allocation8 + $0x38] sm:$0xf]
        %v2025 = vld [vmem:[#allocation8 + $0x3c] sm:$0xf]
        %v2034 = vunpack.c.l.b16 %v2002
        %v2035 = vunpack.c.l.b16 %v2003
        %v2036 = vunpack.c.l.b16 %v2004
        %v2037 = vunpack.c.l.b16 %v2005
        %v2038 = vunpack.c.l.b16 %v2006
        %v2039 = vunpack.c.l.b16 %v2007
        %v2040 = vunpack.c.l.b16 %v2008
        %v2041 = vunpack.c.l.b16 %v2009
        %v2042 = vpack.c.b16 %v2035, %v2034
        %v2043 = vpack.c.b16 %v2037, %v2036
        %v2044 = vpack.c.b16 %v2039, %v2038
        %v2045 = vpack.c.b16 %v2041, %v2040
        %v2066 = vunpack.c.l.b16 %v2010
        %v2067 = vunpack.c.l.b16 %v2011
        %v2068 = vunpack.c.l.b16 %v2012
        %v2069 = vunpack.c.l.b16 %v2013
        %v2070 = vunpack.c.l.b16 %v2014
        %v2071 = vunpack.c.l.b16 %v2015
        %v2072 = vunpack.c.l.b16 %v2016
        %v2073 = vunpack.c.l.b16 %v2017
        %v2074 = vunpack.c.l.b16 %v2018
        %v2075 = vunpack.c.l.b16 %v2019
        %v2076 = vunpack.c.l.b16 %v2020
        %v2077 = vunpack.c.l.b16 %v2021
        %v2078 = vunpack.c.l.b16 %v2022
        %v2079 = vunpack.c.l.b16 %v2023
        %v2080 = vunpack.c.l.b16 %v2024
        %v2081 = vunpack.c.l.b16 %v2025
        %v2082 = vpack.c.b16 %v2067, %v2066
        %v2083 = vpack.c.b16 %v2069, %v2068
        %v2084 = vpack.c.b16 %v2071, %v2070
        %v2085 = vpack.c.b16 %v2073, %v2072
        %v2086 = vpack.c.b16 %v2075, %v2074
        %v2087 = vpack.c.b16 %v2077, %v2076
        %v2088 = vpack.c.b16 %v2079, %v2078
        %v2089 = vpack.c.b16 %v2081, %v2080
        %2098 = vmatprep.subr.bf16.mxu0 0
        %2099 = vmatpush1.bf16.msra.mxu0 %v2089
        %2100 = vmatprep.subr.bf16.mxu0 0
        %2101 = vmatpush1.bf16.msra.mxu0 %v2088
        %2102 = vmatprep.subr.bf16.mxu0 0
        %2103 = vmatpush1.bf16.msra.mxu0 %v2087
        %2104 = vmatprep.subr.bf16.mxu0 0
        %2105 = vmatpush1.bf16.msra.mxu0 %v2086
        %2106 = vmatprep.subr.bf16.mxu0 0
        %2107 = vmatpush1.bf16.msra.mxu0 %v2085
        %2108 = vmatprep.subr.bf16.mxu0 0
        %2109 = vmatpush1.bf16.msra.mxu0 %v2084
        %2110 = vmatprep.subr.bf16.mxu0 0
        %2111 = vmatpush1.bf16.msra.mxu0 %v2083
        %2112 = vmatprep.subr.bf16.mxu0 0
        %2113 = vmatpush1.bf16.msra.mxu0 %v2082
        %2114 = vmatprep.subr.bf16.mxu0 0
        %2115 = vmatpush2.bf16.msra.mxu0 0
        %2116 = vmatprep.subr.bf16.mxu0 0
        %2117 = vmatpush2.bf16.msra.mxu0 0
        %2118 = vmatprep.subr.bf16.mxu0 0
        %2119 = vmatpush2.bf16.msra.mxu0 0
        %2120 = vmatprep.subr.bf16.mxu0 0
        %2121 = vmatpush2.bf16.msra.mxu0 0
        %2122 = vmatprep.subr.bf16.mxu0 0
        %2123 = vmatpush2.bf16.msra.mxu0 0
        %2124 = vmatprep.subr.bf16.mxu0 0
        %2125 = vmatpush2.bf16.msra.mxu0 0
        %2126 = vmatprep.subr.bf16.mxu0 0
        %2127 = vmatpush2.bf16.msra.mxu0 0
        %2128 = vmatprep.subr.bf16.mxu0 0
        %2129 = vmatpush2.bf16.msra.mxu0 0
        %2130 = vmatprep.mubr.bf16.mxu0 0
        %2131 = vmatmul.mubr.bf16.gmra.mxu0 %v2042
        %v2132 = vpop.f32.mrf.mxu0
        %v2133 = vadd.f32 0.0, %v2132
        %v2134 = vpop.f32.mrf.mxu0
        %v2135 = vpop.f32.mrf.mxu0
        %v2136 = vadd.f32 0.0, %v2135
        %v2137 = vpop.f32.mrf.mxu0
        %2138 = vmatprep.mubr.bf16.mxu0 0
        %2139 = vmatmul.mubr.bf16.gmra.mxu0 %v2043
        %v2140 = vpop.f32.mrf.mxu0
        %v2141 = vadd.f32 0.0, %v2140
        %v2142 = vpop.f32.mrf.mxu0
        %v2143 = vpop.f32.mrf.mxu0
        %v2144 = vadd.f32 0.0, %v2143
        %v2145 = vpop.f32.mrf.mxu0
        %2146 = vmatprep.mubr.bf16.mxu0 0
        %2147 = vmatmul.mubr.bf16.gmra.mxu0 %v2044
        %v2148 = vpop.f32.mrf.mxu0
        %v2149 = vadd.f32 0.0, %v2148
        %v2150 = vpop.f32.mrf.mxu0
        %v2151 = vpop.f32.mrf.mxu0
        %v2152 = vadd.f32 0.0, %v2151
        %v2153 = vpop.f32.mrf.mxu0
        %2154 = vmatprep.mubr.bf16.mxu0 0
        %2155 = vmatmul.mubr.bf16.gmra.mxu0 %v2045
        %v2156 = vpop.f32.mrf.mxu0
        %v2157 = vadd.f32 0.0, %v2156
        %v2158 = vpop.f32.mrf.mxu0
        %v2159 = vpop.f32.mrf.mxu0
        %v2160 = vadd.f32 0.0, %v2159
        %v2161 = vpop.f32.mrf.mxu0
        %2162 = vdwg.mxu0
        %v2163 = vpack.c.bf16 %v2133, %v2133
        %v2164 = vpack.c.bf16 %v2136, %v2136
        %v2165 = vpack.c.bf16 %v2141, %v2141
        %v2166 = vpack.c.bf16 %v2144, %v2144
        %v2167 = vpack.c.bf16 %v2149, %v2149
        %v2168 = vpack.c.bf16 %v2152, %v2152
        %v2169 = vpack.c.bf16 %v2157, %v2157
        %v2170 = vpack.c.bf16 %v2160, %v2160
        %2171 = vst [vmem:[%s282] sm:$0xf] %v2163
        %2172 = vst [vmem:[%s282 + $0x4] sm:$0xf] %v2164
        %2173 = vst [vmem:[%s282 + $0x8] sm:$0xf] %v2165
        %2174 = vst [vmem:[%s282 + $0xc] sm:$0xf] %v2166
        %2175 = vst [vmem:[%s282 + $0x10] sm:$0xf] %v2167
        %2176 = vst [vmem:[%s282 + $0x14] sm:$0xf] %v2168
        %2177 = vst [vmem:[%s282 + $0x18] sm:$0xf] %v2169
        %2178 = vst [vmem:[%s282 + $0x1c] sm:$0xf] %v2170
        %v2179 = vadd.f32 %v2133, %v2136
        %v2180 = vadd.f32 %v2179, %v2141
        %v2181 = vadd.f32 %v2180, %v2144
        %v2182 = vadd.f32 %v2181, %v2149
        %v2183 = vadd.f32 %v2182, %v2152
        %v2184 = vadd.f32 %v2183, %v2157
        %v2185 = vadd.f32 %v2184, %v2160
        %v2186 = vrot.slane %v2185, 4
        %v2187 = vadd.f32 %v2185, %v2186
        %v2188 = vrot.slane %v2187, 2
        %v2189 = vadd.f32 %v2187, %v2188
        %v2190 = vrot.slane %v2189, 1
        %v2191 = vadd.f32 %v2189, %v2190
        %v2192 = vmul.f32 %v2133, %v2133
        %v2193 = vmul.f32 %v2136, %v2136
        %v2194 = vmul.f32 %v2141, %v2141
        %v2195 = vmul.f32 %v2144, %v2144
        %v2196 = vmul.f32 %v2149, %v2149
        %v2197 = vmul.f32 %v2152, %v2152
        %v2198 = vmul.f32 %v2157, %v2157
        %v2199 = vmul.f32 %v2160, %v2160
        %v2200 = vadd.f32 %v2192, %v2193
        %v2201 = vadd.f32 %v2200, %v2194
        %v2202 = vadd.f32 %v2201, %v2195
        %v2203 = vadd.f32 %v2202, %v2196
        %v2204 = vadd.f32 %v2203, %v2197
        %v2205 = vadd.f32 %v2204, %v2198
        %v2206 = vadd.f32 %v2205, %v2199
        %v2207 = vrot.slane %v2206, 4
        %v2208 = vadd.f32 %v2206, %v2207
        %v2209 = vrot.slane %v2208, 2
        %v2210 = vadd.f32 %v2208, %v2209
        %v2211 = vrot.slane %v2210, 1
        %v2212 = vadd.f32 %v2210, %v2211
        %vm2213 = vcmask 1040384
        %v2214 = vsel %vm2213, %v1980, %v2001
        %vm2215 = vcmask 1041408
        %v2216 = vsel %vm2215, %v2214, %v2191
        %vm2217 = vcmask 1042432
        %v2218 = vsel %vm2217, %v2216, %v2212
        %2219 = vst [vmem:[%s289] sm:$0xf] %v2218
        %s2220 = sand.u32 %s103, 1
        %s2221 = scalar_lea.sflag [#allocation5], %s2220
        %s2222 = sand.u32 %s103, 1
        %s2223 = smul.addr %s2222, 32
        %s2224 = scalar_lea.vmem [#allocation9], %s2223
        %s2225 = sand.u32 %s27, 1
        %s2226 = scalar_lea.sflag [#allocation11], %s2225
        %s2227 = sand.u32 %s129, 1
        %s2228 = smul.addr %s2227, 32
        %s2229 = scalar_lea.vmem [#allocation10], %s2228
        %s2230 = sand.u32 %s27, 1
        %s2231 = scalar_lea.sflag [#allocation11], %s2230
        %s2232 = sand.u32 %s155, 1
        %s2233 = smul.addr %s2232, 4
        %s2234 = scalar_lea.vmem [#allocation12], %s2233
        // Predicated region
        $region45: #{tpu_custom_call.1} parent=31 // pred_check
          %p2235 = pneg %p113
        $region46: #{tpu_custom_call.1} parent=31 // pred_check_branch
          %2237 = sbr.rel (%p2235) target = $region48
        $region47: #{tpu_custom_call.1} parent=31 // pred_region
          %s2239 = ssub.s32 512, 512
          %2240 = vsyncadd %s2221, %s2239
          %s2241 = smul.addr %s27, 8
          %s2242 = smul.addr %s2241, 64
          %s2243 = scalar_lea.hbm %s3, %s2242
          %s2244 = sshll.u32 %s2224, 4
          %s2245 = int_to_ptr.vmem [resolvable:$true] %s2244
          %2250 = dma.vmem_to_hbm [thread:$0]  %s2245, 512, %s2243, %s2221, 64, 64, 4
        $region48: #{tpu_custom_call.1} parent=31 // pred_fallthru
          _
        // Predicated region
        $region49: #{tpu_custom_call.1} parent=31 // pred_check
          %p2251 = pneg %p139
        $region50: #{tpu_custom_call.1} parent=31 // pred_check_branch
          %2253 = sbr.rel (%p2251) target = $region52
        $region51: #{tpu_custom_call.1} parent=31 // pred_region
          %s2255 = ssub.s32 512, 512
          %2256 = vsyncadd %s2226, %s2255
          %s2257 = smul.addr %s27, 8
          %s2258 = smul.addr %s2257, 64
          %s2259 = scalar_lea.hbm %s4, %s2258
          %s2260 = sshll.u32 %s2229, 4
          %s2261 = int_to_ptr.vmem [resolvable:$true] %s2260
          %2266 = dma.vmem_to_hbm [thread:$0]  %s2261, 512, %s2259, %s2226, 64, 64, 4
        $region52: #{tpu_custom_call.1} parent=31 // pred_fallthru
          _
        // Predicated region
        $region53: #{tpu_custom_call.1} parent=31 // pred_check
          %p2267 = pneg %p165
        $region54: #{tpu_custom_call.1} parent=31 // pred_check_branch
          %2269 = sbr.rel (%p2267) target = $region56
        $region55: #{tpu_custom_call.1} parent=31 // pred_region
          %s2271 = ssub.s32 64, 64
          %2272 = vsyncadd %s2231, %s2271
          %s2273 = smul.addr %s27, 64
          %s2274 = scalar_lea.hbm %s5, %s2273
          %s2276 = sshll.u32 %s2234, 4
          %s2277 = int_to_ptr.vmem [resolvable:$true] %s2276
          %2279 = dma.vmem_to_hbm [thread:$0]  %s2277, 64, %s2274, %s2231
        $region56: #{tpu_custom_call.1} parent=31 // pred_fallthru
          _
      $region32: #{tpu_custom_call.1} parent=5 // pred_fallthru
        _
      %p2280 = scmp.le.s32.totalorder 2, %s22
      // Predicated region
      $region57: #{tpu_custom_call.1} parent=5 // pred_check
        %p2281 = pneg %p2280
      $region58: #{tpu_custom_call.1} parent=5 // pred_check_branch
        %2283 = sbr.rel (%p2281) target = $region60
      $region59: #{tpu_custom_call.1} parent=5 // pred_region
        %s2284 = ssub.s32 %s22, 2
        // Predicated region
        $region61: #{tpu_custom_call.1} parent=59 // pred_check
          %p2285 = pneg %p119
        $region62: #{tpu_custom_call.1} parent=59 // pred_check_branch
          %2287 = sbr.rel (%p2285) target = $region64
        $region63: #{tpu_custom_call.1} parent=59 // pred_region
          %s2288 = sand.u32 %s104, 1
          %s2289 = scalar_lea.sflag [#allocation5], %s2288
          %s2290 = sand.u32 %s104, 1
          %s2291 = smul.addr %s2290, 32
          %s2292 = scalar_lea.vmem [#allocation9], %s2291
          %2293 = dma.done %s2289, 512
        $region64: #{tpu_custom_call.1} parent=59 // pred_fallthru
          _
        // Predicated region
        $region65: #{tpu_custom_call.1} parent=59 // pred_check
          %p2294 = pneg %p145
        $region66: #{tpu_custom_call.1} parent=59 // pred_check_branch
          %2296 = sbr.rel (%p2294) target = $region68
        $region67: #{tpu_custom_call.1} parent=59 // pred_region
          %s2297 = sand.u32 %s28, 1
          %s2298 = scalar_lea.sflag [#allocation11], %s2297
          %s2299 = sand.u32 %s130, 1
          %s2300 = smul.addr %s2299, 32
          %s2301 = scalar_lea.vmem [#allocation10], %s2300
          %2302 = dma.done %s2298, 512
        $region68: #{tpu_custom_call.1} parent=59 // pred_fallthru
          _
        // Predicated region
        $region69: #{tpu_custom_call.1} parent=59 // pred_check
          %p2303 = pneg %p171
        $region70: #{tpu_custom_call.1} parent=59 // pred_check_branch
          %2305 = sbr.rel (%p2303) target = $region72
        $region71: #{tpu_custom_call.1} parent=59 // pred_region
          %s2306 = sand.u32 %s28, 1
          %s2307 = scalar_lea.sflag [#allocation11], %s2306
          %s2308 = sand.u32 %s156, 1
          %s2309 = smul.addr %s2308, 4
          %s2310 = scalar_lea.vmem [#allocation12], %s2309
          %2311 = dma.done %s2307, 64
        $region72: #{tpu_custom_call.1} parent=59 // pred_fallthru
          _
      $region60: #{tpu_custom_call.1} parent=5 // pred_fallthru
        _
    $region6: #{tpu_custom_call.1} parent=1 // loop_footer
      %s26 = sadd.s32 1, %s22
    $region7: #{tpu_custom_call.1} parent=1 // loop_footer_branch
      %21 = sbr.rel target = $region3
    $region8: #{tpu_custom_call.1} parent=1 // loop_exit
      _
    %2312 = vsyncpa [#allocation4], 1
    %s2313 = scalar_lea.sflag [#allocation4], 1
    %2314 = vsyncpa %s2313, 1
    %2315 = vsyncpa [#allocation7], 1
    %2316 = vsyncpa [#allocation5], 1
    %s2317 = scalar_lea.sflag [#allocation5], 1
    %2318 = vsyncpa %s2317, 1
    %2319 = vsyncpa [#allocation11], 1
    %s2320 = scalar_lea.sflag [#allocation11], 1
    %2321 = vsyncpa %s2320, 1

</llo_original>
